<compile_context>
chip_gen: v7x
topology: tpu7x:2x2x1
jax: 0.10.0
libtpu: 0.0.40
codegen_flags: <defaults>
</compile_context>

<pallas_src>
import jax
import jax.numpy as jnp
from jax.experimental import pallas as pl
from jax.experimental.pallas import tpu as pltpu

# ---- small, module-consistent hyperparameters -------------------------------
BATCH = 20          # self.batch_size (hardcoded to 20 in __init__)
B = 2 * BATCH       # LSTM batch (rows carried by hidden state) = 40
SEQ = 16            # seq_size (doppler_sequence_length25)
HID = 16            # hidden_size_doppler (== SEQ so the .view(40, seq_size) holds)
LAYERS = 2          # num_layers_doppler
T = 4               # seq_amount = combine_wave_input // seq_size
FC_HID = 128        # 64 * 2
FC_OUT = 2          # 1 * 2

H2 = 2 * HID        # 32  fused hidden/cell width  [layer0 | layer1]
G2 = 8 * HID        # 128 fused gate width, gate-interleaved [i0 i1 f0 f1 g0 g1 o0 o1]


def doppler_kernel(xext_ref, hc0_ref, cc0_ref, w_in_ref, bias_ref, wbd_ref,
                   w1a_ref, w1b_ref, bf1_ref, w2_ref, bf2_ref,
                   vel_ref, hout_ref, cout_ref, add_ref):
    H = HID

    # Hoisted lane-dense input projection for ALL wavefront steps (one matmul):
    #   rows s*B:(s+1)*B -> layer-0 gate cols = x_s @ wih0 + (b_ih0+b_hh0),
    #                       layer-1 gate cols = (b_ih1+b_hh1).
    # Last B rows of xext are zeros -> bias-only block for the final step.
    add_ref[...] = (jnp.dot(xext_ref[...], w_in_ref[...],
                            preferred_element_type=jnp.float32) + bias_ref[...])

    # hoisted constants
    lane_g = jax.lax.broadcasted_iota(jnp.int32, (B, G2), 1)
    g_mask = (lane_g >= 4 * H) & (lane_g < 6 * H)      # tanh lanes (g-gates, both layers)
    lane_s = jax.lax.broadcasted_iota(jnp.int32, (B, H2), 1)
    l0_mask = lane_s < H                               # layer-0 half of the fused state

    wbd = wbd_ref[...]        # (2H, 8H) fused [whh0 | wih1 ; 0 | whh1]
    hc = hc0_ref[...]         # (B, 2H)  [h0 | h1]
    cc = cc0_ref[...]         # (B, 2H)  [c0 | c1]

    # Wavefront: step s = (layer 0, t=s) + (layer 1, t=s-1) in ONE fused matmul.
    # Serial dependent-matmul chain length: T + LAYERS - 1 = 5 (was 8).
    for s in range(T + 1):
        gates = add_ref[s * B:(s + 1) * B, :] + jnp.dot(
            hc, wbd, preferred_element_type=jnp.float32)              # (B, 8H)
        act = jnp.where(g_mask, jnp.tanh(gates), jax.nn.sigmoid(gates))
        i_c = act[:, 0 * H2:1 * H2]
        f_c = act[:, 1 * H2:2 * H2]
        g_c = act[:, 2 * H2:3 * H2]
        o_c = act[:, 3 * H2:4 * H2]
        c_new = f_c * cc + i_c * g_c
        h_new = o_c * jnp.tanh(c_new)
        if s == 0:            # layer-1 lane half not started yet -> commit layer-0 only
            cc = jnp.where(l0_mask, c_new, cc)
            hc = jnp.where(l0_mask, h_new, hc)
        elif s == T:          # layer-0 finished -> commit layer-1 only
            cc = jnp.where(l0_mask, cc, c_new)
            hc = jnp.where(l0_mask, hc, h_new)
        else:
            cc = c_new
            hc = h_new

    # final hidden / cell states, (LAYERS, B, H) like PyTorch (epilogue)
    hout_ref[0] = hc[:, :H]
    hout_ref[1] = hc[:, H:]
    cout_ref[0] = cc[:, :H]
    cout_ref[1] = cc[:, H:]

    # ---- head (one-time epilogue, off the recurrent critical path) ----
    # last-timestep layer-1 output == hc[:, H:] == view(2*BATCH, SEQ) since H == SEQ.
    last = hc[:, H:]
    v = (jnp.dot(last[:BATCH, :], w1a_ref[...], preferred_element_type=jnp.float32)
         + jnp.dot(last[BATCH:, :], w1b_ref[...], preferred_element_type=jnp.float32)
         + bf1_ref[...])                      # == cat(last[:20], last[20:], dim=1) @ w1 + b1
    v = jnp.maximum(v, 0.0)                   # ReLU (dropout in fc == identity, eval)
    v = jnp.dot(v, w2_ref[...], preferred_element_type=jnp.float32) + bf2_ref[...]
    vel_ref[...] = v                          # (20, 2)


def _interleave_gates(a, b):
    # (R, 4H) x 2 -> (R, 8H) columns [i_a i_b f_a f_b g_a g_b o_a o_b]
    r = a.shape[0]
    return jnp.stack([a.reshape(r, 4, HID), b.reshape(r, 4, HID)],
                     axis=2).reshape(r, 8 * HID)


def doppler_forward(waves, h0, c0, wih, whh, b, w1, b1, w2, b2):
    # The reference forward's `.view(2*batch_size, seq_size)` is only an identity
    # when hidden_size == seq_size; guard against silent config drift.
    assert SEQ == HID, "DopplerNet method=2.5 requires hidden_size == seq_size"
    assert waves.shape == (B, T, SEQ)

    # Wrapper-side layout / weight plumbing (free, outside the kernel):
    #  - time-major flatten + a zero block so the whole input-side projection
    #    (incl. the final bias-only wavefront step) is one matmul,
    #  - fused gate-interleaved block weights for the wavefront recurrence,
    #  - fused [h0|h1], [c0|c1] initial state,
    #  - split w1 rows so the head avoids an in-kernel lane-concat.
    x_flat = jnp.transpose(waves, (1, 0, 2)).reshape(T * B, SEQ)
    x_ext = jnp.concatenate([x_flat, jnp.zeros((B, SEQ), x_flat.dtype)], axis=0)

    w_in = _interleave_gates(wih[0], jnp.zeros_like(wih[0]))               # (SEQ, 8H)
    bias_comb = _interleave_gates(b[0], b[1])                              # (1, 8H)
    w_bd = jnp.concatenate(
        [_interleave_gates(whh[0], wih[1]),
         _interleave_gates(jnp.zeros_like(whh[0]), whh[1])], axis=0)       # (2H, 8H)

    hc0 = jnp.concatenate([h0[0], h0[1]], axis=-1)                         # (B, 2H)
    cc0 = jnp.concatenate([c0[0], c0[1]], axis=-1)                         # (B, 2H)
    w1a, w1b = w1[:SEQ, :], w1[SEQ:, :]

    vmem = pl.BlockSpec(memory_space=pltpu.MemorySpace.VMEM)
    out_shapes = (
        jax.ShapeDtypeStruct((BATCH, FC_OUT), jnp.float32),
        jax.ShapeDtypeStruct((LAYERS, B, HID), jnp.float32),
        jax.ShapeDtypeStruct((LAYERS, B, HID), jnp.float32),
    )

    args = (x_ext, hc0, cc0, w_in, bias_comb, w_bd, w1a, w1b, b1, w2, b2)

    flops = (2 * (T + 1) * B * SEQ * G2          # hoisted input projection
             + 2 * (T + 1) * B * H2 * G2         # fused wavefront recurrent matmuls
             + 2 * BATCH * (2 * SEQ) * FC_HID    # fc1 (split-weight, same flops)
             + 2 * BATCH * FC_HID * FC_OUT)      # fc2
    transcendentals = (T + 1) * B * (2 * G2 + H2)    # dense sigmoid+tanh + tanh(c)
    bytes_accessed = 4 * (sum(int(a.size) for a in args)
                          + BATCH * FC_OUT + 2 * LAYERS * B * HID)

    return pl.pallas_call(
        doppler_kernel,
        out_shape=out_shapes,
        in_specs=[vmem] * len(args),
        out_specs=(vmem, vmem, vmem),
        scratch_shapes=[pltpu.VMEM(((T + 1) * B, G2), jnp.float32)],
        cost_estimate=pl.CostEstimate(flops=flops,
                                      transcendentals=transcendentals,
                                      bytes_accessed=bytes_accessed),
    )(*args)


# ---- pure-JAX reference (same math, original layout) for a correctness check --
def reference_forward(waves, h0, c0, wih, whh, b, w1, b1, w2, b2):
    x = waves
    h_out, c_out = [], []
    for layer in range(LAYERS):
        h, c = h0[layer], c0[layer]
        outs = []
        for t in range(T):
            gates = x[:, t, :] @ wih[layer] + h @ whh[layer] + b[layer]
            i = jax.nn.sigmoid(gates[:, 0 * HID:1 * HID])
            f = jax.nn.sigmoid(gates[:, 1 * HID:2 * HID])
            g = jnp.tanh(gates[:, 2 * HID:3 * HID])
            o = jax.nn.sigmoid(gates[:, 3 * HID:4 * HID])
            c = f * c + i * g
            h = o * jnp.tanh(c)
            outs.append(h)
        x = jnp.stack(outs, axis=1)
        h_out.append(h)
        c_out.append(c)
    last = x[:, -1, :].reshape(2 * BATCH, SEQ)
    v = jnp.concatenate([last[:BATCH], last[BATCH:]], axis=1)
    v = jnp.maximum(v @ w1 + b1, 0.0)
    v = v @ w2 + b2
    return v, jnp.stack(h_out), jnp.stack(c_out)


if __name__ == "__main__":
    key = jax.random.PRNGKey(0)
    ks = jax.random.split(key, 10)
    bound = 1.0 / jnp.sqrt(HID)

    # inputs (waves = concatenated obs + predicted spectra, already split into seqs)
    waves = jax.random.normal(ks[0], (B, T, SEQ), dtype=jnp.float32)
    h0 = jnp.zeros((LAYERS, B, HID), dtype=jnp.float32)   # init_hidden()
    c0 = jnp.zeros((LAYERS, B, HID), dtype=jnp.float32)

    # LSTM parameters (PyTorch layout, pre-transposed to (in, 4H)); combined bias
    wih = jax.random.uniform(ks[1], (LAYERS, HID, 4 * HID), jnp.float32, -bound, bound)
    whh = jax.random.uniform(ks[2], (LAYERS, HID, 4 * HID), jnp.float32, -bound, bound)
    b = jax.random.uniform(ks[3], (LAYERS, 1, 4 * HID), jnp.float32, -bound, bound)

    # fc: Linear(2*SEQ, 128) -> ReLU -> Dropout -> Linear(128, 2)
    w1 = jax.random.uniform(ks[4], (2 * SEQ, FC_HID), jnp.float32, -bound, bound)
    b1 = jax.random.uniform(ks[5], (1, FC_HID), jnp.float32, -bound, bound)
    w2 = jax.random.uniform(ks[6], (FC_HID, FC_OUT), jnp.float32, -bound, bound)
    b2 = jax.random.uniform(ks[7], (1, FC_OUT), jnp.float32, -bound, bound)

    vel, h_n, c_n = doppler_forward(waves, h0, c0, wih, whh, b, w1, b1, w2, b2)
    jax.block_until_ready((vel, h_n, c_n))

    vel_ref, h_ref, c_ref = reference_forward(waves, h0, c0, wih, whh, b, w1, b1, w2, b2)
    assert vel.shape == (BATCH, FC_OUT)
    assert h_n.shape == (LAYERS, B, HID) and c_n.shape == (LAYERS, B, HID)
    assert jnp.allclose(vel, vel_ref, atol=1e-5, rtol=1e-5)
    assert jnp.allclose(h_n, h_ref, atol=1e-5, rtol=1e-5)
    assert jnp.allclose(c_n, c_ref, atol=1e-5, rtol=1e-5)

    print("KERNEL_OK")
</pallas_src>

<mosaic_0001>
module attributes {stable_mosaic.version = 11 : i64} {
  func.func @doppler_kernel(%arg0: memref<200x16xf32, #tpu.memory_space<vmem>>, %arg1: memref<40x32xf32, #tpu.memory_space<vmem>>, %arg2: memref<40x32xf32, #tpu.memory_space<vmem>>, %arg3: memref<16x128xf32, #tpu.memory_space<vmem>>, %arg4: memref<1x128xf32, #tpu.memory_space<vmem>>, %arg5: memref<32x128xf32, #tpu.memory_space<vmem>>, %arg6: memref<16x128xf32, #tpu.memory_space<vmem>>, %arg7: memref<16x128xf32, #tpu.memory_space<vmem>>, %arg8: memref<1x128xf32, #tpu.memory_space<vmem>>, %arg9: memref<128x2xf32, #tpu.memory_space<vmem>>, %arg10: memref<1x2xf32, #tpu.memory_space<vmem>>, %arg11: memref<20x2xf32, #tpu.memory_space<vmem>>, %arg12: memref<2x40x16xf32, #tpu.memory_space<vmem>>, %arg13: memref<2x40x16xf32, #tpu.memory_space<vmem>>, %arg14: memref<200x128xf32, #tpu.memory_space<vmem>>) attributes {dimension_semantics = [], scalar_prefetch = 0 : i64, scratch_operands = 1 : i64, tpu.core_type = #tpu.core_type<tc>} {
    %c0 = arith.constant 0 : index
    %c0_0 = arith.constant 0 : index
    %0 = vector.load %arg0[%c0, %c0_0] : memref<200x16xf32, #tpu.memory_space<vmem>>, vector<200x16xf32>
    %c0_1 = arith.constant 0 : index
    %c0_2 = arith.constant 0 : index
    %1 = vector.load %arg3[%c0_1, %c0_2] : memref<16x128xf32, #tpu.memory_space<vmem>>, vector<16x128xf32>
    %cst = arith.constant dense<0.000000e+00> : vector<200x128xf32>
    %2 = tpu.matmul %0, %1, %cst {dimension_numbers = #tpu.dot_dimension_numbers<[1], [0], [0], [1], [0, 0, 1, 1], [], []>} : vector<200x16xf32>, vector<16x128xf32>, vector<200x128xf32> -> vector<200x128xf32>
    %c0_3 = arith.constant 0 : index
    %c0_4 = arith.constant 0 : index
    %3 = vector.load %arg4[%c0_3, %c0_4] : memref<1x128xf32, #tpu.memory_space<vmem>>, vector<1x128xf32>
    %4 = vector.broadcast %3 : vector<1x128xf32> to vector<200x128xf32>
    %5 = arith.addf %2, %4 : vector<200x128xf32>
    %c0_5 = arith.constant 0 : index
    %c0_6 = arith.constant 0 : index
    %6 = vector.load %arg14[%c0_5, %c0_6] : memref<200x128xf32, #tpu.memory_space<vmem>>, vector<200x128xf32>
    tpu.vector_store %arg14[%c0_5, %c0_6], %5 {strides = array<i32>} : memref<200x128xf32, #tpu.memory_space<vmem>>, vector<200x128xf32>,
    %7 = tpu.iota {dimensions = array<i32: 1>} : vector<40x128xi32>
    %c64_i32 = arith.constant 64 : i32
    %8 = vector.broadcast %c64_i32 : i32 to vector<40x128xi32>
    %9 = arith.cmpi sge, %7, %8 : vector<40x128xi32>
    %c96_i32 = arith.constant 96 : i32
    %10 = vector.broadcast %c96_i32 : i32 to vector<40x128xi32>
    %11 = arith.cmpi slt, %7, %10 : vector<40x128xi32>
    %12 = arith.andi %9, %11 : vector<40x128xi1>
    %13 = tpu.iota {dimensions = array<i32: 1>} : vector<40x32xi32>
    %c16_i32 = arith.constant 16 : i32
    %14 = vector.broadcast %c16_i32 : i32 to vector<40x32xi32>
    %15 = arith.cmpi slt, %13, %14 : vector<40x32xi32>
    %c0_7 = arith.constant 0 : index
    %c0_8 = arith.constant 0 : index
    %16 = vector.load %arg5[%c0_7, %c0_8] : memref<32x128xf32, #tpu.memory_space<vmem>>, vector<32x128xf32>
    %c0_9 = arith.constant 0 : index
    %c0_10 = arith.constant 0 : index
    %17 = vector.load %arg1[%c0_9, %c0_10] : memref<40x32xf32, #tpu.memory_space<vmem>>, vector<40x32xf32>
    %c0_11 = arith.constant 0 : index
    %c0_12 = arith.constant 0 : index
    %18 = vector.load %arg2[%c0_11, %c0_12] : memref<40x32xf32, #tpu.memory_space<vmem>>, vector<40x32xf32>
    %c0_13 = arith.constant 0 : index
    %c0_14 = arith.constant 0 : index
    %19 = vector.load %arg14[%c0_13, %c0_14] : memref<200x128xf32, #tpu.memory_space<vmem>>, vector<40x128xf32>
    %cst_15 = arith.constant dense<0.000000e+00> : vector<40x128xf32>
    %20 = tpu.matmul %17, %16, %cst_15 {dimension_numbers = #tpu.dot_dimension_numbers<[1], [0], [0], [1], [0, 0, 1, 1], [], []>} : vector<40x32xf32>, vector<32x128xf32>, vector<40x128xf32> -> vector<40x128xf32>
    %21 = arith.addf %19, %20 : vector<40x128xf32>
    %22 = math.tanh %21 : vector<40x128xf32>
    %23 = arith.negf %21 : vector<40x128xf32>
    %24 = math.exp %23 : vector<40x128xf32>
    %cst_16 = arith.constant 1.000000e+00 : f32
    %25 = vector.broadcast %cst_16 : f32 to vector<40x128xf32>
    %26 = arith.addf %25, %24 : vector<40x128xf32>
    %27 = arith.divf %25, %26 : vector<40x128xf32>
    %28 = arith.select %12, %22, %27 : vector<40x128xi1>, vector<40x128xf32>
    %29 = vector.extract_strided_slice %28 {offsets = [0, 0], sizes = [40, 32], strides = [1, 1]} : vector<40x128xf32> to vector<40x32xf32>
    %30 = vector.extract_strided_slice %28 {offsets = [0, 32], sizes = [40, 32], strides = [1, 1]} : vector<40x128xf32> to vector<40x32xf32>
    %31 = vector.extract_strided_slice %28 {offsets = [0, 64], sizes = [40, 32], strides = [1, 1]} : vector<40x128xf32> to vector<40x32xf32>
    %32 = vector.extract_strided_slice %28 {offsets = [0, 96], sizes = [40, 32], strides = [1, 1]} : vector<40x128xf32> to vector<40x32xf32>
    %33 = arith.mulf %30, %18 : vector<40x32xf32>
    %34 = arith.mulf %29, %31 : vector<40x32xf32>
    %35 = arith.addf %33, %34 : vector<40x32xf32>
    %36 = math.tanh %35 : vector<40x32xf32>
    %37 = arith.mulf %32, %36 : vector<40x32xf32>
    %38 = arith.select %15, %35, %18 : vector<40x32xi1>, vector<40x32xf32>
    %39 = arith.select %15, %37, %17 : vector<40x32xi1>, vector<40x32xf32>
    %c40 = arith.constant 40 : index
    %c0_17 = arith.constant 0 : index
    %40 = vector.load %arg14[%c40, %c0_17] : memref<200x128xf32, #tpu.memory_space<vmem>>, vector<40x128xf32>
    %cst_18 = arith.constant dense<0.000000e+00> : vector<40x128xf32>
    %41 = tpu.matmul %39, %16, %cst_18 {dimension_numbers = #tpu.dot_dimension_numbers<[1], [0], [0], [1], [0, 0, 1, 1], [], []>} : vector<40x32xf32>, vector<32x128xf32>, vector<40x128xf32> -> vector<40x128xf32>
    %42 = arith.addf %40, %41 : vector<40x128xf32>
    %43 = math.tanh %42 : vector<40x128xf32>
    %44 = arith.negf %42 : vector<40x128xf32>
    %45 = math.exp %44 : vector<40x128xf32>
    %cst_19 = arith.constant 1.000000e+00 : f32
    %46 = vector.broadcast %cst_19 : f32 to vector<40x128xf32>
    %47 = arith.addf %46, %45 : vector<40x128xf32>
    %48 = arith.divf %46, %47 : vector<40x128xf32>
    %49 = arith.select %12, %43, %48 : vector<40x128xi1>, vector<40x128xf32>
    %50 = vector.extract_strided_slice %49 {offsets = [0, 0], sizes = [40, 32], strides = [1, 1]} : vector<40x128xf32> to vector<40x32xf32>
    %51 = vector.extract_strided_slice %49 {offsets = [0, 32], sizes = [40, 32], strides = [1, 1]} : vector<40x128xf32> to vector<40x32xf32>
    %52 = vector.extract_strided_slice %49 {offsets = [0, 64], sizes = [40, 32], strides = [1, 1]} : vector<40x128xf32> to vector<40x32xf32>
    %53 = vector.extract_strided_slice %49 {offsets = [0, 96], sizes = [40, 32], strides = [1, 1]} : vector<40x128xf32> to vector<40x32xf32>
    %54 = arith.mulf %51, %38 : vector<40x32xf32>
    %55 = arith.mulf %50, %52 : vector<40x32xf32>
    %56 = arith.addf %54, %55 : vector<40x32xf32>
    %57 = math.tanh %56 : vector<40x32xf32>
    %58 = arith.mulf %53, %57 : vector<40x32xf32>
    %c80 = arith.constant 80 : index
    %c0_20 = arith.constant 0 : index
    %59 = vector.load %arg14[%c80, %c0_20] : memref<200x128xf32, #tpu.memory_space<vmem>>, vector<40x128xf32>
    %cst_21 = arith.constant dense<0.000000e+00> : vector<40x128xf32>
    %60 = tpu.matmul %58, %16, %cst_21 {dimension_numbers = #tpu.dot_dimension_numbers<[1], [0], [0], [1], [0, 0, 1, 1], [], []>} : vector<40x32xf32>, vector<32x128xf32>, vector<40x128xf32> -> vector<40x128xf32>
    %61 = arith.addf %59, %60 : vector<40x128xf32>
    %62 = math.tanh %61 : vector<40x128xf32>
    %63 = arith.negf %61 : vector<40x128xf32>
    %64 = math.exp %63 : vector<40x128xf32>
    %cst_22 = arith.constant 1.000000e+00 : f32
    %65 = vector.broadcast %cst_22 : f32 to vector<40x128xf32>
    %66 = arith.addf %65, %64 : vector<40x128xf32>
    %67 = arith.divf %65, %66 : vector<40x128xf32>
    %68 = arith.select %12, %62, %67 : vector<40x128xi1>, vector<40x128xf32>
    %69 = vector.extract_strided_slice %68 {offsets = [0, 0], sizes = [40, 32], strides = [1, 1]} : vector<40x128xf32> to vector<40x32xf32>
    %70 = vector.extract_strided_slice %68 {offsets = [0, 32], sizes = [40, 32], strides = [1, 1]} : vector<40x128xf32> to vector<40x32xf32>
    %71 = vector.extract_strided_slice %68 {offsets = [0, 64], sizes = [40, 32], strides = [1, 1]} : vector<40x128xf32> to vector<40x32xf32>
    %72 = vector.extract_strided_slice %68 {offsets = [0, 96], sizes = [40, 32], strides = [1, 1]} : vector<40x128xf32> to vector<40x32xf32>
    %73 = arith.mulf %70, %56 : vector<40x32xf32>
    %74 = arith.mulf %69, %71 : vector<40x32xf32>
    %75 = arith.addf %73, %74 : vector<40x32xf32>
    %76 = math.tanh %75 : vector<40x32xf32>
    %77 = arith.mulf %72, %76 : vector<40x32xf32>
    %c120 = arith.constant 120 : index
    %c0_23 = arith.constant 0 : index
    %78 = vector.load %arg14[%c120, %c0_23] : memref<200x128xf32, #tpu.memory_space<vmem>>, vector<40x128xf32>
    %cst_24 = arith.constant dense<0.000000e+00> : vector<40x128xf32>
    %79 = tpu.matmul %77, %16, %cst_24 {dimension_numbers = #tpu.dot_dimension_numbers<[1], [0], [0], [1], [0, 0, 1, 1], [], []>} : vector<40x32xf32>, vector<32x128xf32>, vector<40x128xf32> -> vector<40x128xf32>
    %80 = arith.addf %78, %79 : vector<40x128xf32>
    %81 = math.tanh %80 : vector<40x128xf32>
    %82 = arith.negf %80 : vector<40x128xf32>
    %83 = math.exp %82 : vector<40x128xf32>
    %cst_25 = arith.constant 1.000000e+00 : f32
    %84 = vector.broadcast %cst_25 : f32 to vector<40x128xf32>
    %85 = arith.addf %84, %83 : vector<40x128xf32>
    %86 = arith.divf %84, %85 : vector<40x128xf32>
    %87 = arith.select %12, %81, %86 : vector<40x128xi1>, vector<40x128xf32>
    %88 = vector.extract_strided_slice %87 {offsets = [0, 0], sizes = [40, 32], strides = [1, 1]} : vector<40x128xf32> to vector<40x32xf32>
    %89 = vector.extract_strided_slice %87 {offsets = [0, 32], sizes = [40, 32], strides = [1, 1]} : vector<40x128xf32> to vector<40x32xf32>
    %90 = vector.extract_strided_slice %87 {offsets = [0, 64], sizes = [40, 32], strides = [1, 1]} : vector<40x128xf32> to vector<40x32xf32>
    %91 = vector.extract_strided_slice %87 {offsets = [0, 96], sizes = [40, 32], strides = [1, 1]} : vector<40x128xf32> to vector<40x32xf32>
    %92 = arith.mulf %89, %75 : vector<40x32xf32>
    %93 = arith.mulf %88, %90 : vector<40x32xf32>
    %94 = arith.addf %92, %93 : vector<40x32xf32>
    %95 = math.tanh %94 : vector<40x32xf32>
    %96 = arith.mulf %91, %95 : vector<40x32xf32>
    %c160 = arith.constant 160 : index
    %c0_26 = arith.constant 0 : index
    %97 = vector.load %arg14[%c160, %c0_26] : memref<200x128xf32, #tpu.memory_space<vmem>>, vector<40x128xf32>
    %cst_27 = arith.constant dense<0.000000e+00> : vector<40x128xf32>
    %98 = tpu.matmul %96, %16, %cst_27 {dimension_numbers = #tpu.dot_dimension_numbers<[1], [0], [0], [1], [0, 0, 1, 1], [], []>} : vector<40x32xf32>, vector<32x128xf32>, vector<40x128xf32> -> vector<40x128xf32>
    %99 = arith.addf %97, %98 : vector<40x128xf32>
    %100 = math.tanh %99 : vector<40x128xf32>
    %101 = arith.negf %99 : vector<40x128xf32>
    %102 = math.exp %101 : vector<40x128xf32>
    %cst_28 = arith.constant 1.000000e+00 : f32
    %103 = vector.broadcast %cst_28 : f32 to vector<40x128xf32>
    %104 = arith.addf %103, %102 : vector<40x128xf32>
    %105 = arith.divf %103, %104 : vector<40x128xf32>
    %106 = arith.select %12, %100, %105 : vector<40x128xi1>, vector<40x128xf32>
    %107 = vector.extract_strided_slice %106 {offsets = [0, 0], sizes = [40, 32], strides = [1, 1]} : vector<40x128xf32> to vector<40x32xf32>
    %108 = vector.extract_strided_slice %106 {offsets = [0, 32], sizes = [40, 32], strides = [1, 1]} : vector<40x128xf32> to vector<40x32xf32>
    %109 = vector.extract_strided_slice %106 {offsets = [0, 64], sizes = [40, 32], strides = [1, 1]} : vector<40x128xf32> to vector<40x32xf32>
    %110 = vector.extract_strided_slice %106 {offsets = [0, 96], sizes = [40, 32], strides = [1, 1]} : vector<40x128xf32> to vector<40x32xf32>
    %111 = arith.mulf %108, %94 : vector<40x32xf32>
    %112 = arith.mulf %107, %109 : vector<40x32xf32>
    %113 = arith.addf %111, %112 : vector<40x32xf32>
    %114 = math.tanh %113 : vector<40x32xf32>
    %115 = arith.mulf %110, %114 : vector<40x32xf32>
    %116 = arith.select %15, %94, %113 : vector<40x32xi1>, vector<40x32xf32>
    %117 = arith.select %15, %96, %115 : vector<40x32xi1>, vector<40x32xf32>
    %118 = vector.extract_strided_slice %117 {offsets = [0, 0], sizes = [40, 16], strides = [1, 1]} : vector<40x32xf32> to vector<40x16xf32>
    %c0_29 = arith.constant 0 : index
    %c0_30 = arith.constant 0 : index
    %c0_31 = arith.constant 0 : index
    %119 = vector.load %arg12[%c0_29, %c0_30, %c0_31] : memref<2x40x16xf32, #tpu.memory_space<vmem>>, vector<1x40x16xf32>
    %120 = vector.shape_cast %119 : vector<1x40x16xf32> to vector<40x16xf32>
    %121 = vector.shape_cast %118 : vector<40x16xf32> to vector<1x40x16xf32>
    tpu.vector_store %arg12[%c0_29, %c0_30, %c0_31], %121 {strides = array<i32>} : memref<2x40x16xf32, #tpu.memory_space<vmem>>, vector<1x40x16xf32>,
    %122 = vector.extract_strided_slice %117 {offsets = [0, 16], sizes = [40, 16], strides = [1, 1]} : vector<40x32xf32> to vector<40x16xf32>
    %c1 = arith.constant 1 : index
    %c0_32 = arith.constant 0 : index
    %c0_33 = arith.constant 0 : index
    %123 = vector.load %arg12[%c1, %c0_32, %c0_33] : memref<2x40x16xf32, #tpu.memory_space<vmem>>, vector<1x40x16xf32>
    %124 = vector.shape_cast %123 : vector<1x40x16xf32> to vector<40x16xf32>
    %125 = vector.shape_cast %122 : vector<40x16xf32> to vector<1x40x16xf32>
    tpu.vector_store %arg12[%c1, %c0_32, %c0_33], %125 {strides = array<i32>} : memref<2x40x16xf32, #tpu.memory_space<vmem>>, vector<1x40x16xf32>,
    %126 = vector.extract_strided_slice %116 {offsets = [0, 0], sizes = [40, 16], strides = [1, 1]} : vector<40x32xf32> to vector<40x16xf32>
    %c0_34 = arith.constant 0 : index
    %c0_35 = arith.constant 0 : index
    %c0_36 = arith.constant 0 : index
    %127 = vector.load %arg13[%c0_34, %c0_35, %c0_36] : memref<2x40x16xf32, #tpu.memory_space<vmem>>, vector<1x40x16xf32>
    %128 = vector.shape_cast %127 : vector<1x40x16xf32> to vector<40x16xf32>
    %129 = vector.shape_cast %126 : vector<40x16xf32> to vector<1x40x16xf32>
    tpu.vector_store %arg13[%c0_34, %c0_35, %c0_36], %129 {strides = array<i32>} : memref<2x40x16xf32, #tpu.memory_space<vmem>>, vector<1x40x16xf32>,
    %130 = vector.extract_strided_slice %116 {offsets = [0, 16], sizes = [40, 16], strides = [1, 1]} : vector<40x32xf32> to vector<40x16xf32>
    %c1_37 = arith.constant 1 : index
    %c0_38 = arith.constant 0 : index
    %c0_39 = arith.constant 0 : index
    %131 = vector.load %arg13[%c1_37, %c0_38, %c0_39] : memref<2x40x16xf32, #tpu.memory_space<vmem>>, vector<1x40x16xf32>
    %132 = vector.shape_cast %131 : vector<1x40x16xf32> to vector<40x16xf32>
    %133 = vector.shape_cast %130 : vector<40x16xf32> to vector<1x40x16xf32>
    tpu.vector_store %arg13[%c1_37, %c0_38, %c0_39], %133 {strides = array<i32>} : memref<2x40x16xf32, #tpu.memory_space<vmem>>, vector<1x40x16xf32>,
    %134 = vector.extract_strided_slice %117 {offsets = [0, 16], sizes = [40, 16], strides = [1, 1]} : vector<40x32xf32> to vector<40x16xf32>
    %135 = vector.extract_strided_slice %134 {offsets = [0, 0], sizes = [20, 16], strides = [1, 1]} : vector<40x16xf32> to vector<20x16xf32>
    %c0_40 = arith.constant 0 : index
    %c0_41 = arith.constant 0 : index
    %136 = vector.load %arg6[%c0_40, %c0_41] : memref<16x128xf32, #tpu.memory_space<vmem>>, vector<16x128xf32>
    %cst_42 = arith.constant dense<0.000000e+00> : vector<20x128xf32>
    %137 = tpu.matmul %135, %136, %cst_42 {dimension_numbers = #tpu.dot_dimension_numbers<[1], [0], [0], [1], [0, 0, 1, 1], [], []>} : vector<20x16xf32>, vector<16x128xf32>, vector<20x128xf32> -> vector<20x128xf32>
    %138 = vector.extract_strided_slice %134 {offsets = [20, 0], sizes = [20, 16], strides = [1, 1]} : vector<40x16xf32> to vector<20x16xf32>
    %c0_43 = arith.constant 0 : index
    %c0_44 = arith.constant 0 : index
    %139 = vector.load %arg7[%c0_43, %c0_44] : memref<16x128xf32, #tpu.memory_space<vmem>>, vector<16x128xf32>
    %cst_45 = arith.constant dense<0.000000e+00> : vector<20x128xf32>
    %140 = tpu.matmul %138, %139, %cst_45 {dimension_numbers = #tpu.dot_dimension_numbers<[1], [0], [0], [1], [0, 0, 1, 1], [], []>} : vector<20x16xf32>, vector<16x128xf32>, vector<20x128xf32> -> vector<20x128xf32>
    %141 = arith.addf %137, %140 : vector<20x128xf32>
    %c0_46 = arith.constant 0 : index
    %c0_47 = arith.constant 0 : index
    %142 = vector.load %arg8[%c0_46, %c0_47] : memref<1x128xf32, #tpu.memory_space<vmem>>, vector<1x128xf32>
    %143 = vector.broadcast %142 : vector<1x128xf32> to vector<20x128xf32>
    %144 = arith.addf %141, %143 : vector<20x128xf32>
    %cst_48 = arith.constant 0.000000e+00 : f32
    %145 = vector.broadcast %cst_48 : f32 to vector<20x128xf32>
    %146 = arith.maximumf %144, %145 : vector<20x128xf32>
    %c0_49 = arith.constant 0 : index
    %c0_50 = arith.constant 0 : index
    %147 = vector.load %arg9[%c0_49, %c0_50] : memref<128x2xf32, #tpu.memory_space<vmem>>, vector<128x2xf32>
    %cst_51 = arith.constant dense<0.000000e+00> : vector<20x2xf32>
    %148 = tpu.matmul %146, %147, %cst_51 {dimension_numbers = #tpu.dot_dimension_numbers<[1], [0], [0], [1], [0, 0, 1, 1], [], []>} : vector<20x128xf32>, vector<128x2xf32>, vector<20x2xf32> -> vector<20x2xf32>
    %c0_52 = arith.constant 0 : index
    %c0_53 = arith.constant 0 : index
    %149 = vector.load %arg10[%c0_52, %c0_53] : memref<1x2xf32, #tpu.memory_space<vmem>>, vector<1x2xf32>
    %150 = vector.broadcast %149 : vector<1x2xf32> to vector<20x2xf32>
    %151 = arith.addf %148, %150 : vector<20x2xf32>
    %c0_54 = arith.constant 0 : index
    %c0_55 = arith.constant 0 : index
    %152 = vector.load %arg11[%c0_54, %c0_55] : memref<20x2xf32, #tpu.memory_space<vmem>>, vector<20x2xf32>
    tpu.vector_store %arg11[%c0_54, %c0_55], %151 {strides = array<i32>} : memref<20x2xf32, #tpu.memory_space<vmem>>, vector<20x2xf32>,
    return
  }
}

</mosaic_0001>

<llo_original>
// kernel: tpu_custom_call.1
$region0: #{tpu_custom_call.1}
  #allocation0 [shape = 'u32[]', space=smem, size = 0x4, offset = 0x4, fixed_abs, tag = 'smem constant byte address 0x4 - core index']
  #allocation1 [shape = 'u32[144,128]{1,0:T(1,128)}', space=vmem, size = 0x12000, scoped, tag = 'internal scratch']
  #allocation2 [shape = 'f32[200,128]{1,0:T(8,128)}', space=vmem, size = 0x19000, scoped, tag = 'scratch operand']
  %s0 = inlined_call_operand.vmem [shape: f32[200,16], index: 0, kind: input, shape index: {}]
  %s1 = inlined_call_operand.vmem [shape: f32[40,32], index: 1, kind: input, shape index: {}]
  %s2 = inlined_call_operand.vmem [shape: f32[40,32], index: 2, kind: input, shape index: {}]
  %s3 = inlined_call_operand.vmem [shape: f32[16,128], index: 3, kind: input, shape index: {}]
  %s4 = inlined_call_operand.vmem [shape: f32[1,128], index: 4, kind: input, shape index: {}]
  %s5 = inlined_call_operand.vmem [shape: f32[32,128], index: 5, kind: input, shape index: {}]
  %s6 = inlined_call_operand.vmem [shape: f32[16,128], index: 6, kind: input, shape index: {}]
  %s7 = inlined_call_operand.vmem [shape: f32[16,128], index: 7, kind: input, shape index: {}]
  %s8 = inlined_call_operand.vmem [shape: f32[1,128], index: 8, kind: input, shape index: {}]
  %s9 = inlined_call_operand.vmem [shape: f32[128,2], index: 9, kind: input, shape index: {}]
  %s10 = inlined_call_operand.vmem [shape: f32[1,2], index: 10, kind: input, shape index: {}]
  %s11 = inlined_call_operand.vmem [shape: f32[20,2], index: 11, kind: output, shape index: {0}]
  %s12 = inlined_call_operand.vmem [shape: f32[2,40,16], index: 12, kind: output, shape index: {1}]
  %s13 = inlined_call_operand.vmem [shape: f32[2,40,16], index: 13, kind: output, shape index: {2}]
  %14 = xla_tuple %s11, %s12, %s13
  %s15 = sld [smem:[#allocation0]]
  $region70: #{tpu_custom_call.1} parent=0
    _
  %s17 = ssub.s32 1, %s15
  %s18 = scalar_select 0, %s17, %s15
  // Predicated region
  $region2: #{tpu_custom_call.1} parent=0 // pred_check
    _
  $region3: #{tpu_custom_call.1} parent=0 // pred_check_branch
    %20 = sbr.rel (0) target = $region5
  $region4: #{tpu_custom_call.1} parent=0 // pred_region
    _
  $region5: #{tpu_custom_call.1} parent=0 // pred_fallthru
    _
  // Predicated region
  $region6: #{tpu_custom_call.1} parent=0 // pred_check
    _
  $region7: #{tpu_custom_call.1} parent=0 // pred_check_branch
    %22 = sbr.rel (0) target = $region9
  $region8: #{tpu_custom_call.1} parent=0 // pred_region
    _
  $region9: #{tpu_custom_call.1} parent=0 // pred_fallthru
    _
  // Predicated region
  $region10: #{tpu_custom_call.1} parent=0 // pred_check
    _
  $region11: #{tpu_custom_call.1} parent=0 // pred_check_branch
    %24 = sbr.rel (0) target = $region13
  $region12: #{tpu_custom_call.1} parent=0 // pred_region
    _
  $region13: #{tpu_custom_call.1} parent=0 // pred_fallthru
    _
  // Predicated region
  $region14: #{tpu_custom_call.1} parent=0 // pred_check
    _
  $region15: #{tpu_custom_call.1} parent=0 // pred_check_branch
    %26 = sbr.rel (0) target = $region17
  $region16: #{tpu_custom_call.1} parent=0 // pred_region
    _
  $region17: #{tpu_custom_call.1} parent=0 // pred_fallthru
    _
  // Predicated region
  $region18: #{tpu_custom_call.1} parent=0 // pred_check
    _
  $region19: #{tpu_custom_call.1} parent=0 // pred_check_branch
    %28 = sbr.rel (0) target = $region21
  $region20: #{tpu_custom_call.1} parent=0 // pred_region
    _
  $region21: #{tpu_custom_call.1} parent=0 // pred_fallthru
    _
  // Predicated region
  $region22: #{tpu_custom_call.1} parent=0 // pred_check
    _
  $region23: #{tpu_custom_call.1} parent=0 // pred_check_branch
    %30 = sbr.rel (0) target = $region25
  $region24: #{tpu_custom_call.1} parent=0 // pred_region
    _
  $region25: #{tpu_custom_call.1} parent=0 // pred_fallthru
    _
  // Predicated region
  $region26: #{tpu_custom_call.1} parent=0 // pred_check
    _
  $region27: #{tpu_custom_call.1} parent=0 // pred_check_branch
    %32 = sbr.rel (0) target = $region29
  $region28: #{tpu_custom_call.1} parent=0 // pred_region
    _
  $region29: #{tpu_custom_call.1} parent=0 // pred_fallthru
    _
  // Predicated region
  $region30: #{tpu_custom_call.1} parent=0 // pred_check
    _
  $region31: #{tpu_custom_call.1} parent=0 // pred_check_branch
    %34 = sbr.rel (0) target = $region33
  $region32: #{tpu_custom_call.1} parent=0 // pred_region
    _
  $region33: #{tpu_custom_call.1} parent=0 // pred_fallthru
    _
  // Predicated region
  $region34: #{tpu_custom_call.1} parent=0 // pred_check
    _
  $region35: #{tpu_custom_call.1} parent=0 // pred_check_branch
    %36 = sbr.rel (0) target = $region37
  $region36: #{tpu_custom_call.1} parent=0 // pred_region
    _
  $region37: #{tpu_custom_call.1} parent=0 // pred_fallthru
    _
  // Predicated region
  $region38: #{tpu_custom_call.1} parent=0 // pred_check
    _
  $region39: #{tpu_custom_call.1} parent=0 // pred_check_branch
    %38 = sbr.rel (0) target = $region41
  $region40: #{tpu_custom_call.1} parent=0 // pred_region
    _
  $region41: #{tpu_custom_call.1} parent=0 // pred_fallthru
    _
  // Predicated region
  $region42: #{tpu_custom_call.1} parent=0 // pred_check
    _
  $region43: #{tpu_custom_call.1} parent=0 // pred_check_branch
    %40 = sbr.rel (0) target = $region45
  $region44: #{tpu_custom_call.1} parent=0 // pred_region
    _
  $region45: #{tpu_custom_call.1} parent=0 // pred_fallthru
    _
  %v41 = vld [vmem:[%s0] sm:$0xff]
  %v42 = vld [vmem:[%s0 + $0x8] sm:$0xff]
  %v43 = vld [vmem:[%s0 + $0x10] sm:$0xff]
  %v44 = vld [vmem:[%s0 + $0x18] sm:$0xff]
  %v45 = vld [vmem:[%s0 + $0x20] sm:$0xff]
  %v46 = vld [vmem:[%s0 + $0x28] sm:$0xff]
  %v47 = vld [vmem:[%s0 + $0x30] sm:$0xff]
  %v48 = vld [vmem:[%s0 + $0x38] sm:$0xff]
  %v49 = vld [vmem:[%s0 + $0x40] sm:$0xff]
  %v50 = vld [vmem:[%s0 + $0x48] sm:$0xff]
  %v51 = vld [vmem:[%s0 + $0x50] sm:$0xff]
  %v52 = vld [vmem:[%s0 + $0x58] sm:$0xff]
  %v53 = vld [vmem:[%s0 + $0x60] sm:$0xff]
  %v54 = vld [vmem:[%s0 + $0x68] sm:$0xff]
  %v55 = vld [vmem:[%s0 + $0x70] sm:$0xff]
  %v56 = vld [vmem:[%s0 + $0x78] sm:$0xff]
  %v57 = vld [vmem:[%s0 + $0x80] sm:$0xff]
  %v58 = vld [vmem:[%s0 + $0x88] sm:$0xff]
  %v59 = vld [vmem:[%s0 + $0x90] sm:$0xff]
  %v60 = vld [vmem:[%s0 + $0x98] sm:$0xff]
  %v61 = vld [vmem:[%s0 + $0xa0] sm:$0xff]
  %v62 = vld [vmem:[%s0 + $0xa8] sm:$0xff]
  %v63 = vld [vmem:[%s0 + $0xb0] sm:$0xff]
  %v64 = vld [vmem:[%s0 + $0xb8] sm:$0xff]
  %v65 = vld [vmem:[%s0 + $0xc0] sm:$0xff]
  %v66 = vld [vmem:[%s3] sm:$0xff]
  %v67 = vld [vmem:[%s3 + $0x8] sm:$0xff]
  %v68 = vld [vmem:[%s4] sm:$0x1]
  %v70 = vlaneseq
  %v71 = vshrl.u32 %v70, 7
  %v72 = vsub.s32 0, %v71
  %v73 = vrot.slane %v68, %v72
  %vm75 = vcmask 130048
  %v77 = vsel %vm75, %v41, 0
  %v80 = vsel %vm75, %v42, 0
  %v83 = vsel %vm75, %v43, 0
  %v86 = vsel %vm75, %v44, 0
  %v89 = vsel %vm75, %v45, 0
  %v92 = vsel %vm75, %v46, 0
  %v95 = vsel %vm75, %v47, 0
  %v98 = vsel %vm75, %v48, 0
  %v101 = vsel %vm75, %v49, 0
  %v104 = vsel %vm75, %v50, 0
  %v107 = vsel %vm75, %v51, 0
  %v110 = vsel %vm75, %v52, 0
  %v113 = vsel %vm75, %v53, 0
  %v116 = vsel %vm75, %v54, 0
  %v119 = vsel %vm75, %v55, 0
  %v122 = vsel %vm75, %v56, 0
  %v125 = vsel %vm75, %v57, 0
  %v128 = vsel %vm75, %v58, 0
  %v131 = vsel %vm75, %v59, 0
  %v134 = vsel %vm75, %v60, 0
  %v137 = vsel %vm75, %v61, 0
  %v140 = vsel %vm75, %v62, 0
  %v143 = vsel %vm75, %v63, 0
  %v146 = vsel %vm75, %v64, 0
  %v149 = vsel %vm75, %v65, 0
  %151 = vmatprep.subr.mxu0 0.0
  %152 = vmatpush1.msra.mxu0 %v66
  %153 = vmatprep.subr.mxu0 0.0
  %154 = vmatpush1.msra.mxu0 %v67
  %155 = vmatprep.subr.mxu0 0.0
  %156 = vmatpush1.msra.mxu0 0.0
  %157 = vmatprep.subr.mxu0 0.0
  %158 = vmatpush1.msra.mxu0 0.0
  %159 = vmatprep.subr.mxu0 0.0
  %160 = vmatpush1.msra.mxu0 0.0
  %161 = vmatprep.subr.mxu0 0.0
  %162 = vmatpush1.msra.mxu0 0.0
  %163 = vmatprep.subr.mxu0 0.0
  %164 = vmatpush1.msra.mxu0 0.0
  %165 = vmatprep.subr.mxu0 0.0
  %166 = vmatpush1.msra.mxu0 0.0
  %167 = vmatprep.subr.mxu0 0.0
  %168 = vmatpush1.msra.mxu0 0.0
  %169 = vmatprep.subr.mxu0 0.0
  %170 = vmatpush1.msra.mxu0 0.0
  %171 = vmatprep.subr.mxu0 0.0
  %172 = vmatpush1.msra.mxu0 0.0
  %173 = vmatprep.subr.mxu0 0.0
  %174 = vmatpush1.msra.mxu0 0.0
  %175 = vmatprep.subr.mxu0 0.0
  %176 = vmatpush1.msra.mxu0 0.0
  %177 = vmatprep.subr.mxu0 0.0
  %178 = vmatpush1.msra.mxu0 0.0
  %179 = vmatprep.subr.mxu0 0.0
  %180 = vmatpush1.msra.mxu0 0.0
  %181 = vmatprep.subr.mxu0 0.0
  %182 = vmatpush1.msra.mxu0 0.0
  %183 = vmatprep.subr.mxu0 0.0
  %184 = vmatpush1.msra.mxu0 0.0
  %185 = vmatprep.subr.mxu0 0.0
  %186 = vmatpush1.msra.mxu0 0.0
  %187 = vmatprep.subr.mxu0 0.0
  %188 = vmatpush1.msra.mxu0 0.0
  %189 = vmatprep.subr.mxu0 0.0
  %190 = vmatpush1.msra.mxu0 0.0
  %191 = vmatprep.subr.mxu0 0.0
  %192 = vmatpush1.msra.mxu0 0.0
  %193 = vmatprep.subr.mxu0 0.0
  %194 = vmatpush1.msra.mxu0 0.0
  %195 = vmatprep.subr.mxu0 0.0
  %196 = vmatpush1.msra.mxu0 0.0
  %197 = vmatprep.subr.mxu0 0.0
  %198 = vmatpush1.msra.mxu0 0.0
  %199 = vmatprep.subr.mxu0 0.0
  %200 = vmatpush1.msra.mxu0 0.0
  %201 = vmatprep.subr.mxu0 0.0
  %202 = vmatpush1.msra.mxu0 0.0
  %203 = vmatprep.subr.mxu0 0.0
  %204 = vmatpush1.msra.mxu0 0.0
  %205 = vmatprep.subr.mxu0 0.0
  %206 = vmatpush1.msra.mxu0 0.0
  %207 = vmatprep.subr.mxu0 0.0
  %208 = vmatpush1.msra.mxu0 0.0
  %209 = vmatprep.subr.mxu0 0.0
  %210 = vmatpush1.msra.mxu0 0.0
  %211 = vmatprep.subr.mxu0 0.0
  %212 = vmatpush1.msra.mxu0 0.0
  %213 = vmatprep.subr.mxu0 0.0
  %214 = vmatpush1.msra.mxu0 0.0
  %215 = vmatprep.mubr.f32.mxu0 0.0
  %216 = vmatmul.mubr.f32.gmra.mrb[0].mxu0 %v77
  %v217 = vpop.f32.mrb[0].mxu0
  %v218 = vadd.f32 %v73, %v217
  %v219 = vpop.f32.mrb[0].mxu0
  %220 = vmatprep.mubr.f32.mxu0 0.0
  %221 = vmatmul.mubr.f32.gmra.mrb[0].mxu0 %v80
  %v222 = vpop.f32.mrb[0].mxu0
  %v223 = vadd.f32 %v73, %v222
  %v224 = vpop.f32.mrb[0].mxu0
  %225 = vmatprep.mubr.f32.mxu0 0.0
  %226 = vmatmul.mubr.f32.gmra.mrb[0].mxu0 %v83
  %v227 = vpop.f32.mrb[0].mxu0
  %v228 = vadd.f32 %v73, %v227
  %v229 = vpop.f32.mrb[0].mxu0
  %230 = vmatprep.mubr.f32.mxu0 0.0
  %231 = vmatmul.mubr.f32.gmra.mrb[0].mxu0 %v86
  %v232 = vpop.f32.mrb[0].mxu0
  %v233 = vadd.f32 %v73, %v232
  %v234 = vpop.f32.mrb[0].mxu0
  %235 = vmatprep.mubr.f32.mxu0 0.0
  %236 = vmatmul.mubr.f32.gmra.mrb[0].mxu0 %v89
  %v237 = vpop.f32.mrb[0].mxu0
  %v238 = vadd.f32 %v73, %v237
  %v239 = vpop.f32.mrb[0].mxu0
  %240 = vmatprep.mubr.f32.mxu0 0.0
  %241 = vmatmul.mubr.f32.gmra.mrb[0].mxu0 %v92
  %v242 = vpop.f32.mrb[0].mxu0
  %v243 = vadd.f32 %v73, %v242
  %v244 = vpop.f32.mrb[0].mxu0
  %245 = vmatprep.mubr.f32.mxu0 0.0
  %246 = vmatmul.mubr.f32.gmra.mrb[0].mxu0 %v95
  %v247 = vpop.f32.mrb[0].mxu0
  %v248 = vadd.f32 %v73, %v247
  %v249 = vpop.f32.mrb[0].mxu0
  %250 = vmatprep.mubr.f32.mxu0 0.0
  %251 = vmatmul.mubr.f32.gmra.mrb[0].mxu0 %v98
  %v252 = vpop.f32.mrb[0].mxu0
  %v253 = vadd.f32 %v73, %v252
  %v254 = vpop.f32.mrb[0].mxu0
  %255 = vmatprep.mubr.f32.mxu0 0.0
  %256 = vmatmul.mubr.f32.gmra.mrb[0].mxu0 %v101
  %v257 = vpop.f32.mrb[0].mxu0
  %v258 = vadd.f32 %v73, %v257
  %v259 = vpop.f32.mrb[0].mxu0
  %260 = vmatprep.mubr.f32.mxu0 0.0
  %261 = vmatmul.mubr.f32.gmra.mrb[0].mxu0 %v104
  %v262 = vpop.f32.mrb[0].mxu0
  %v263 = vadd.f32 %v73, %v262
  %v264 = vpop.f32.mrb[0].mxu0
  %265 = vmatprep.mubr.f32.mxu0 0.0
  %266 = vmatmul.mubr.f32.gmra.mrb[0].mxu0 %v107
  %v267 = vpop.f32.mrb[0].mxu0
  %v268 = vadd.f32 %v73, %v267
  %v269 = vpop.f32.mrb[0].mxu0
  %270 = vmatprep.mubr.f32.mxu0 0.0
  %271 = vmatmul.mubr.f32.gmra.mrb[0].mxu0 %v110
  %v272 = vpop.f32.mrb[0].mxu0
  %v273 = vadd.f32 %v73, %v272
  %v274 = vpop.f32.mrb[0].mxu0
  %275 = vmatprep.mubr.f32.mxu0 0.0
  %276 = vmatmul.mubr.f32.gmra.mrb[0].mxu0 %v113
  %v277 = vpop.f32.mrb[0].mxu0
  %v278 = vadd.f32 %v73, %v277
  %v279 = vpop.f32.mrb[0].mxu0
  %280 = vmatprep.mubr.f32.mxu0 0.0
  %281 = vmatmul.mubr.f32.gmra.mrb[0].mxu0 %v116
  %v282 = vpop.f32.mrb[0].mxu0
  %v283 = vadd.f32 %v73, %v282
  %v284 = vpop.f32.mrb[0].mxu0
  %285 = vmatprep.mubr.f32.mxu0 0.0
  %286 = vmatmul.mubr.f32.gmra.mrb[0].mxu0 %v119
  %v287 = vpop.f32.mrb[0].mxu0
  %v288 = vadd.f32 %v73, %v287
  %v289 = vpop.f32.mrb[0].mxu0
  %290 = vmatprep.mubr.f32.mxu0 0.0
  %291 = vmatmul.mubr.f32.gmra.mrb[0].mxu0 %v122
  %v292 = vpop.f32.mrb[0].mxu0
  %v293 = vadd.f32 %v73, %v292
  %v294 = vpop.f32.mrb[0].mxu0
  %295 = vmatprep.mubr.f32.mxu0 0.0
  %296 = vmatmul.mubr.f32.gmra.mrb[0].mxu0 %v125
  %v297 = vpop.f32.mrb[0].mxu0
  %v298 = vadd.f32 %v73, %v297
  %v299 = vpop.f32.mrb[0].mxu0
  %300 = vmatprep.mubr.f32.mxu0 0.0
  %301 = vmatmul.mubr.f32.gmra.mrb[0].mxu0 %v128
  %v302 = vpop.f32.mrb[0].mxu0
  %v303 = vadd.f32 %v73, %v302
  %v304 = vpop.f32.mrb[0].mxu0
  %305 = vmatprep.mubr.f32.mxu0 0.0
  %306 = vmatmul.mubr.f32.gmra.mrb[0].mxu0 %v131
  %v307 = vpop.f32.mrb[0].mxu0
  %v308 = vadd.f32 %v73, %v307
  %v309 = vpop.f32.mrb[0].mxu0
  %310 = vmatprep.mubr.f32.mxu0 0.0
  %311 = vmatmul.mubr.f32.gmra.mrb[0].mxu0 %v134
  %v312 = vpop.f32.mrb[0].mxu0
  %v313 = vadd.f32 %v73, %v312
  %v314 = vpop.f32.mrb[0].mxu0
  %315 = vmatprep.mubr.f32.mxu0 0.0
  %316 = vmatmul.mubr.f32.gmra.mrb[0].mxu0 %v137
  %v317 = vpop.f32.mrb[0].mxu0
  %v318 = vadd.f32 %v73, %v317
  %v319 = vpop.f32.mrb[0].mxu0
  %320 = vmatprep.mubr.f32.mxu0 0.0
  %321 = vmatmul.mubr.f32.gmra.mrb[0].mxu0 %v140
  %v322 = vpop.f32.mrb[0].mxu0
  %v323 = vadd.f32 %v73, %v322
  %v324 = vpop.f32.mrb[0].mxu0
  %325 = vmatprep.mubr.f32.mxu0 0.0
  %326 = vmatmul.mubr.f32.gmra.mrb[0].mxu0 %v143
  %v327 = vpop.f32.mrb[0].mxu0
  %v328 = vadd.f32 %v73, %v327
  %v329 = vpop.f32.mrb[0].mxu0
  %330 = vmatprep.mubr.f32.mxu0 0.0
  %331 = vmatmul.mubr.f32.gmra.mrb[0].mxu0 %v146
  %v332 = vpop.f32.mrb[0].mxu0
  %v333 = vadd.f32 %v73, %v332
  %v334 = vpop.f32.mrb[0].mxu0
  %335 = vmatprep.mubr.f32.mxu0 0.0
  %336 = vmatmul.mubr.f32.gmra.mrb[0].mxu0 %v149
  %v337 = vpop.f32.mrb[0].mxu0
  %v338 = vadd.f32 %v73, %v337
  %v339 = vpop.f32.mrb[0].mxu0
  %340 = vdwg.mxu0
  %341 = vst [vmem:[#allocation2] sm:$0xff] %v218
  %342 = vst [vmem:[#allocation2 + $0x8] sm:$0xff] %v223
  %343 = vst [vmem:[#allocation2 + $0x10] sm:$0xff] %v228
  %344 = vst [vmem:[#allocation2 + $0x18] sm:$0xff] %v233
  %345 = vst [vmem:[#allocation2 + $0x20] sm:$0xff] %v238
  %346 = vst [vmem:[#allocation2 + $0x28] sm:$0xff] %v243
  %347 = vst [vmem:[#allocation2 + $0x30] sm:$0xff] %v248
  %348 = vst [vmem:[#allocation2 + $0x38] sm:$0xff] %v253
  %349 = vst [vmem:[#allocation2 + $0x40] sm:$0xff] %v258
  %350 = vst [vmem:[#allocation2 + $0x48] sm:$0xff] %v263
  %351 = vst [vmem:[#allocation2 + $0x50] sm:$0xff] %v268
  %352 = vst [vmem:[#allocation2 + $0x58] sm:$0xff] %v273
  %353 = vst [vmem:[#allocation2 + $0x60] sm:$0xff] %v278
  %354 = vst [vmem:[#allocation2 + $0x68] sm:$0xff] %v283
  %355 = vst [vmem:[#allocation2 + $0x70] sm:$0xff] %v288
  %356 = vst [vmem:[#allocation2 + $0x78] sm:$0xff] %v293
  %357 = vst [vmem:[#allocation2 + $0x80] sm:$0xff] %v298
  %358 = vst [vmem:[#allocation2 + $0x88] sm:$0xff] %v303
  %359 = vst [vmem:[#allocation2 + $0x90] sm:$0xff] %v308
  %360 = vst [vmem:[#allocation2 + $0x98] sm:$0xff] %v313
  %361 = vst [vmem:[#allocation2 + $0xa0] sm:$0xff] %v318
  %362 = vst [vmem:[#allocation2 + $0xa8] sm:$0xff] %v323
  %363 = vst [vmem:[#allocation2 + $0xb0] sm:$0xff] %v328
  %364 = vst [vmem:[#allocation2 + $0xb8] sm:$0xff] %v333
  %365 = vst [vmem:[#allocation2 + $0xc0] sm:$0xff] %v338
  %v366 = vlaneseq
  %v367 = vand.u32 %v366, 127
  %vm368 = vcmp.ge.s32.totalorder %v367, 64
  %vm369 = vcmp.lt.s32.totalorder %v367, 96
  %vm370 = vmand %vm368, %vm369
  %vm371 = vcmp.lt.s32.totalorder %v367, 16
  %v372 = vld [vmem:[%s5] sm:$0xff]
  %v373 = vld [vmem:[%s5 + $0x8] sm:$0xff]
  %v374 = vld [vmem:[%s5 + $0x10] sm:$0xff]
  %v375 = vld [vmem:[%s5 + $0x18] sm:$0xff]
  %v376 = vld [vmem:[%s1] sm:$0xff]
  %v377 = vld [vmem:[%s1 + $0x8] sm:$0xff]
  %v378 = vld [vmem:[%s1 + $0x10] sm:$0xff]
  %v379 = vld [vmem:[%s1 + $0x18] sm:$0xff]
  %v380 = vld [vmem:[%s1 + $0x20] sm:$0xff]
  %v381 = vld [vmem:[%s2] sm:$0xff]
  %v382 = vld [vmem:[%s2 + $0x8] sm:$0xff]
  %v383 = vld [vmem:[%s2 + $0x10] sm:$0xff]
  %v384 = vld [vmem:[%s2 + $0x18] sm:$0xff]
  %v385 = vld [vmem:[%s2 + $0x20] sm:$0xff]
  %v386 = vld [vmem:[#allocation2] sm:$0xff]
  %v387 = vld [vmem:[#allocation2 + $0x8] sm:$0xff]
  %v388 = vld [vmem:[#allocation2 + $0x10] sm:$0xff]
  %v389 = vld [vmem:[#allocation2 + $0x18] sm:$0xff]
  %v390 = vld [vmem:[#allocation2 + $0x20] sm:$0xff]
  %vm391 = vcmask 261120
  %v393 = vsel %vm391, %v376, 0
  %v396 = vsel %vm391, %v377, 0
  %v399 = vsel %vm391, %v378, 0
  %v402 = vsel %vm391, %v379, 0
  %v405 = vsel %vm391, %v380, 0
  %407 = vmatprep.subr.mxu0 0.0
  %408 = vmatpush1.msra.mxu0 %v372
  %409 = vmatprep.subr.mxu0 0.0
  %410 = vmatpush1.msra.mxu0 %v373
  %411 = vmatprep.subr.mxu0 0.0
  %412 = vmatpush1.msra.mxu0 %v374
  %413 = vmatprep.subr.mxu0 0.0
  %414 = vmatpush1.msra.mxu0 %v375
  %415 = vmatprep.subr.mxu0 0.0
  %416 = vmatpush1.msra.mxu0 0.0
  %417 = vmatprep.subr.mxu0 0.0
  %418 = vmatpush1.msra.mxu0 0.0
  %419 = vmatprep.subr.mxu0 0.0
  %420 = vmatpush1.msra.mxu0 0.0
  %421 = vmatprep.subr.mxu0 0.0
  %422 = vmatpush1.msra.mxu0 0.0
  %423 = vmatprep.subr.mxu0 0.0
  %424 = vmatpush1.msra.mxu0 0.0
  %425 = vmatprep.subr.mxu0 0.0
  %426 = vmatpush1.msra.mxu0 0.0
  %427 = vmatprep.subr.mxu0 0.0
  %428 = vmatpush1.msra.mxu0 0.0
  %429 = vmatprep.subr.mxu0 0.0
  %430 = vmatpush1.msra.mxu0 0.0
  %431 = vmatprep.subr.mxu0 0.0
  %432 = vmatpush1.msra.mxu0 0.0
  %433 = vmatprep.subr.mxu0 0.0
  %434 = vmatpush1.msra.mxu0 0.0
  %435 = vmatprep.subr.mxu0 0.0
  %436 = vmatpush1.msra.mxu0 0.0
  %437 = vmatprep.subr.mxu0 0.0
  %438 = vmatpush1.msra.mxu0 0.0
  %439 = vmatprep.subr.mxu0 0.0
  %440 = vmatpush1.msra.mxu0 0.0
  %441 = vmatprep.subr.mxu0 0.0
  %442 = vmatpush1.msra.mxu0 0.0
  %443 = vmatprep.subr.mxu0 0.0
  %444 = vmatpush1.msra.mxu0 0.0
  %445 = vmatprep.subr.mxu0 0.0
  %446 = vmatpush1.msra.mxu0 0.0
  %447 = vmatprep.subr.mxu0 0.0
  %448 = vmatpush1.msra.mxu0 0.0
  %449 = vmatprep.subr.mxu0 0.0
  %450 = vmatpush1.msra.mxu0 0.0
  %451 = vmatprep.subr.mxu0 0.0
  %452 = vmatpush1.msra.mxu0 0.0
  %453 = vmatprep.subr.mxu0 0.0
  %454 = vmatpush1.msra.mxu0 0.0
  %455 = vmatprep.subr.mxu0 0.0
  %456 = vmatpush1.msra.mxu0 0.0
  %457 = vmatprep.subr.mxu0 0.0
  %458 = vmatpush1.msra.mxu0 0.0
  %459 = vmatprep.subr.mxu0 0.0
  %460 = vmatpush1.msra.mxu0 0.0
  %461 = vmatprep.subr.mxu0 0.0
  %462 = vmatpush1.msra.mxu0 0.0
  %463 = vmatprep.subr.mxu0 0.0
  %464 = vmatpush1.msra.mxu0 0.0
  %465 = vmatprep.subr.mxu0 0.0
  %466 = vmatpush1.msra.mxu0 0.0
  %467 = vmatprep.subr.mxu0 0.0
  %468 = vmatpush1.msra.mxu0 0.0
  %469 = vmatprep.subr.mxu0 0.0
  %470 = vmatpush1.msra.mxu0 0.0
  %471 = vmatprep.mubr.f32.mxu0 0.0
  %472 = vmatmul.mubr.f32.gmra.mrb[0].mxu0 %v393
  %v473 = vpop.f32.mrb[0].mxu0
  %v474 = vadd.f32 0.0, %v473
  %v475 = vpop.f32.mrb[0].mxu0
  %476 = vmatprep.mubr.f32.mxu0 0.0
  %477 = vmatmul.mubr.f32.gmra.mrb[0].mxu0 %v396
  %v478 = vpop.f32.mrb[0].mxu0
  %v479 = vadd.f32 0.0, %v478
  %v480 = vpop.f32.mrb[0].mxu0
  %481 = vmatprep.mubr.f32.mxu0 0.0
  %482 = vmatmul.mubr.f32.gmra.mrb[0].mxu0 %v399
  %v483 = vpop.f32.mrb[0].mxu0
  %v484 = vadd.f32 0.0, %v483
  %v485 = vpop.f32.mrb[0].mxu0
  %486 = vmatprep.mubr.f32.mxu0 0.0
  %487 = vmatmul.mubr.f32.gmra.mrb[0].mxu0 %v402
  %v488 = vpop.f32.mrb[0].mxu0
  %v489 = vadd.f32 0.0, %v488
  %v490 = vpop.f32.mrb[0].mxu0
  %491 = vmatprep.mubr.f32.mxu0 0.0
  %492 = vmatmul.mubr.f32.gmra.mrb[0].mxu0 %v405
  %v493 = vpop.f32.mrb[0].mxu0
  %v494 = vadd.f32 0.0, %v493
  %v495 = vpop.f32.mrb[0].mxu0
  %496 = vdwg.mxu0
  %v497 = vadd.f32 %v386, %v474
  %v498 = vadd.f32 %v387, %v479
  %v499 = vadd.f32 %v388, %v484
  %v500 = vadd.f32 %v389, %v489
  %v501 = vadd.f32 %v390, %v494
  %v502 = vtanh.pop %v497
  %v503 = vtanh.pop %v498
  %v504 = vtanh.pop %v499
  %v505 = vtanh.pop %v500
  %v506 = vtanh.pop %v501
  %v507 = vxor.u32 %v497, 2147483648
  %v508 = vxor.u32 %v498, 2147483648
  %v509 = vxor.u32 %v499, 2147483648
  %v510 = vxor.u32 %v500, 2147483648
  %v511 = vxor.u32 %v501, 2147483648
  %v512 = vmul.f32 %v507, 1.442695
  %v513 = vpow.pop %v512
  %v514 = vmul.f32 %v508, 1.442695
  %v515 = vpow.pop %v514
  %v516 = vmul.f32 %v509, 1.442695
  %v517 = vpow.pop %v516
  %v518 = vmul.f32 %v510, 1.442695
  %v519 = vpow.pop %v518
  %v520 = vmul.f32 %v511, 1.442695
  %v521 = vpow.pop %v520
  %v522 = vadd.f32 %v513, 1.0
  %v523 = vadd.f32 %v515, 1.0
  %v524 = vadd.f32 %v517, 1.0
  %v525 = vadd.f32 %v519, 1.0
  %v526 = vadd.f32 %v521, 1.0
  %v527 = vrcp.pop %v522
  %v528 = vmul.f32 1.0, %v527
  %v529 = vrcp.pop %v523
  %v530 = vmul.f32 1.0, %v529
  %v531 = vrcp.pop %v524
  %v532 = vmul.f32 1.0, %v531
  %v533 = vrcp.pop %v525
  %v534 = vmul.f32 1.0, %v533
  %v535 = vrcp.pop %v526
  %v536 = vmul.f32 1.0, %v535
  %v537 = vsel %vm370, %v502, %v528
  %v538 = vsel %vm370, %v503, %v530
  %v539 = vsel %vm370, %v504, %v532
  %v540 = vsel %vm370, %v505, %v534
  %v541 = vsel %vm370, %v506, %v536
  %547 = vrot.lane.b32.xlu0 %v381, 32
  %v548 = vpop.permute.xlu0 %547
  %549 = vrot.lane.b32.xlu0 %v382, 32
  %v550 = vpop.permute.xlu0 %549
  %551 = vrot.lane.b32.xlu0 %v383, 32
  %v552 = vpop.permute.xlu0 %551
  %553 = vrot.lane.b32.xlu0 %v384, 32
  %v554 = vpop.permute.xlu0 %553
  %555 = vrot.lane.b32.xlu0 %v385, 32
  %v556 = vpop.permute.xlu0 %555
  %v562 = vmul.f32 %v537, %v548
  %v563 = vmul.f32 %v538, %v550
  %v564 = vmul.f32 %v539, %v552
  %v565 = vmul.f32 %v540, %v554
  %v566 = vmul.f32 %v541, %v556
  %572 = vrot.lane.b32.xlu0 %v537, 64
  %v573 = vpop.permute.xlu0 %572
  %574 = vrot.lane.b32.xlu0 %v538, 64
  %v575 = vpop.permute.xlu0 %574
  %576 = vrot.lane.b32.xlu0 %v539, 64
  %v577 = vpop.permute.xlu0 %576
  %578 = vrot.lane.b32.xlu0 %v540, 64
  %v579 = vpop.permute.xlu0 %578
  %580 = vrot.lane.b32.xlu0 %v541, 64
  %v581 = vpop.permute.xlu0 %580
  %v587 = vmul.f32 %v537, %v573
  %v588 = vmul.f32 %v538, %v575
  %v589 = vmul.f32 %v539, %v577
  %v590 = vmul.f32 %v540, %v579
  %v591 = vmul.f32 %v541, %v581
  %597 = vrot.lane.b32.xlu0 %v587, 32
  %v598 = vpop.permute.xlu0 %597
  %599 = vrot.lane.b32.xlu0 %v588, 32
  %v600 = vpop.permute.xlu0 %599
  %601 = vrot.lane.b32.xlu0 %v589, 32
  %v602 = vpop.permute.xlu0 %601
  %603 = vrot.lane.b32.xlu0 %v590, 32
  %v604 = vpop.permute.xlu0 %603
  %605 = vrot.lane.b32.xlu0 %v591, 32
  %v606 = vpop.permute.xlu0 %605
  %v612 = vadd.f32 %v562, %v598
  %v613 = vadd.f32 %v563, %v600
  %v614 = vadd.f32 %v564, %v602
  %v615 = vadd.f32 %v565, %v604
  %v616 = vadd.f32 %v566, %v606
  %v617 = vtanh.pop %v612
  %v618 = vtanh.pop %v613
  %v619 = vtanh.pop %v614
  %v620 = vtanh.pop %v615
  %v621 = vtanh.pop %v616
  %627 = vrot.lane.b32.xlu0 %v617, 64
  %v628 = vpop.permute.xlu0 %627
  %629 = vrot.lane.b32.xlu0 %v618, 64
  %v630 = vpop.permute.xlu0 %629
  %631 = vrot.lane.b32.xlu0 %v619, 64
  %v632 = vpop.permute.xlu0 %631
  %633 = vrot.lane.b32.xlu0 %v620, 64
  %v634 = vpop.permute.xlu0 %633
  %635 = vrot.lane.b32.xlu0 %v621, 64
  %v636 = vpop.permute.xlu0 %635
  %v642 = vmul.f32 %v537, %v628
  %v643 = vmul.f32 %v538, %v630
  %v644 = vmul.f32 %v539, %v632
  %v645 = vmul.f32 %v540, %v634
  %v646 = vmul.f32 %v541, %v636
  %652 = vrot.lane.b32.xlu0 %v612, 96
  %v653 = vpop.permute.xlu0 %652
  %654 = vrot.lane.b32.xlu0 %v613, 96
  %v655 = vpop.permute.xlu0 %654
  %656 = vrot.lane.b32.xlu0 %v614, 96
  %v657 = vpop.permute.xlu0 %656
  %658 = vrot.lane.b32.xlu0 %v615, 96
  %v659 = vpop.permute.xlu0 %658
  %660 = vrot.lane.b32.xlu0 %v616, 96
  %v661 = vpop.permute.xlu0 %660
  %v667 = vsel %vm371, %v653, %v381
  %v668 = vsel %vm371, %v655, %v382
  %v669 = vsel %vm371, %v657, %v383
  %v670 = vsel %vm371, %v659, %v384
  %v671 = vsel %vm371, %v661, %v385
  %677 = vrot.lane.b32.xlu0 %v642, 32
  %v678 = vpop.permute.xlu0 %677
  %679 = vrot.lane.b32.xlu0 %v643, 32
  %v680 = vpop.permute.xlu0 %679
  %681 = vrot.lane.b32.xlu0 %v644, 32
  %v682 = vpop.permute.xlu0 %681
  %683 = vrot.lane.b32.xlu0 %v645, 32
  %v684 = vpop.permute.xlu0 %683
  %685 = vrot.lane.b32.xlu0 %v646, 32
  %v686 = vpop.permute.xlu0 %685
  %v692 = vsel %vm371, %v678, %v376
  %v693 = vsel %vm371, %v680, %v377
  %v694 = vsel %vm371, %v682, %v378
  %v695 = vsel %vm371, %v684, %v379
  %v696 = vsel %vm371, %v686, %v380
  %v697 = vld [vmem:[#allocation2 + $0x28] sm:$0xff]
  %v698 = vld [vmem:[#allocation2 + $0x30] sm:$0xff]
  %v699 = vld [vmem:[#allocation2 + $0x38] sm:$0xff]
  %v700 = vld [vmem:[#allocation2 + $0x40] sm:$0xff]
  %v701 = vld [vmem:[#allocation2 + $0x48] sm:$0xff]
  %v703 = vsel %vm391, %v692, 0
  %v706 = vsel %vm391, %v693, 0
  %v709 = vsel %vm391, %v694, 0
  %v712 = vsel %vm391, %v695, 0
  %v715 = vsel %vm391, %v696, 0
  %717 = vmatprep.subr.mxu0 0.0
  %718 = vmatpush1.msra.mxu0 %v372
  %719 = vmatprep.subr.mxu0 0.0
  %720 = vmatpush1.msra.mxu0 %v373
  %721 = vmatprep.subr.mxu0 0.0
  %722 = vmatpush1.msra.mxu0 %v374
  %723 = vmatprep.subr.mxu0 0.0
  %724 = vmatpush1.msra.mxu0 %v375
  %725 = vmatprep.subr.mxu0 0.0
  %726 = vmatpush1.msra.mxu0 0.0
  %727 = vmatprep.subr.mxu0 0.0
  %728 = vmatpush1.msra.mxu0 0.0
  %729 = vmatprep.subr.mxu0 0.0
  %730 = vmatpush1.msra.mxu0 0.0
  %731 = vmatprep.subr.mxu0 0.0
  %732 = vmatpush1.msra.mxu0 0.0
  %733 = vmatprep.subr.mxu0 0.0
  %734 = vmatpush1.msra.mxu0 0.0
  %735 = vmatprep.subr.mxu0 0.0
  %736 = vmatpush1.msra.mxu0 0.0
  %737 = vmatprep.subr.mxu0 0.0
  %738 = vmatpush1.msra.mxu0 0.0
  %739 = vmatprep.subr.mxu0 0.0
  %740 = vmatpush1.msra.mxu0 0.0
  %741 = vmatprep.subr.mxu0 0.0
  %742 = vmatpush1.msra.mxu0 0.0
  %743 = vmatprep.subr.mxu0 0.0
  %744 = vmatpush1.msra.mxu0 0.0
  %745 = vmatprep.subr.mxu0 0.0
  %746 = vmatpush1.msra.mxu0 0.0
  %747 = vmatprep.subr.mxu0 0.0
  %748 = vmatpush1.msra.mxu0 0.0
  %749 = vmatprep.subr.mxu0 0.0
  %750 = vmatpush1.msra.mxu0 0.0
  %751 = vmatprep.subr.mxu0 0.0
  %752 = vmatpush1.msra.mxu0 0.0
  %753 = vmatprep.subr.mxu0 0.0
  %754 = vmatpush1.msra.mxu0 0.0
  %755 = vmatprep.subr.mxu0 0.0
  %756 = vmatpush1.msra.mxu0 0.0
  %757 = vmatprep.subr.mxu0 0.0
  %758 = vmatpush1.msra.mxu0 0.0
  %759 = vmatprep.subr.mxu0 0.0
  %760 = vmatpush1.msra.mxu0 0.0
  %761 = vmatprep.subr.mxu0 0.0
  %762 = vmatpush1.msra.mxu0 0.0
  %763 = vmatprep.subr.mxu0 0.0
  %764 = vmatpush1.msra.mxu0 0.0
  %765 = vmatprep.subr.mxu0 0.0
  %766 = vmatpush1.msra.mxu0 0.0
  %767 = vmatprep.subr.mxu0 0.0
  %768 = vmatpush1.msra.mxu0 0.0
  %769 = vmatprep.subr.mxu0 0.0
  %770 = vmatpush1.msra.mxu0 0.0
  %771 = vmatprep.subr.mxu0 0.0
  %772 = vmatpush1.msra.mxu0 0.0
  %773 = vmatprep.subr.mxu0 0.0
  %774 = vmatpush1.msra.mxu0 0.0
  %775 = vmatprep.subr.mxu0 0.0
  %776 = vmatpush1.msra.mxu0 0.0
  %777 = vmatprep.subr.mxu0 0.0
  %778 = vmatpush1.msra.mxu0 0.0
  %779 = vmatprep.subr.mxu0 0.0
  %780 = vmatpush1.msra.mxu0 0.0
  %781 = vmatprep.mubr.f32.mxu0 0.0
  %782 = vmatmul.mubr.f32.gmra.mrb[0].mxu0 %v703
  %v783 = vpop.f32.mrb[0].mxu0
  %v784 = vadd.f32 0.0, %v783
  %v785 = vpop.f32.mrb[0].mxu0
  %786 = vmatprep.mubr.f32.mxu0 0.0
  %787 = vmatmul.mubr.f32.gmra.mrb[0].mxu0 %v706
  %v788 = vpop.f32.mrb[0].mxu0
  %v789 = vadd.f32 0.0, %v788
  %v790 = vpop.f32.mrb[0].mxu0
  %791 = vmatprep.mubr.f32.mxu0 0.0
  %792 = vmatmul.mubr.f32.gmra.mrb[0].mxu0 %v709
  %v793 = vpop.f32.mrb[0].mxu0
  %v794 = vadd.f32 0.0, %v793
  %v795 = vpop.f32.mrb[0].mxu0
  %796 = vmatprep.mubr.f32.mxu0 0.0
  %797 = vmatmul.mubr.f32.gmra.mrb[0].mxu0 %v712
  %v798 = vpop.f32.mrb[0].mxu0
  %v799 = vadd.f32 0.0, %v798
  %v800 = vpop.f32.mrb[0].mxu0
  %801 = vmatprep.mubr.f32.mxu0 0.0
  %802 = vmatmul.mubr.f32.gmra.mrb[0].mxu0 %v715
  %v803 = vpop.f32.mrb[0].mxu0
  %v804 = vadd.f32 0.0, %v803
  %v805 = vpop.f32.mrb[0].mxu0
  %806 = vdwg.mxu0
  %v807 = vadd.f32 %v697, %v784
  %v808 = vadd.f32 %v698, %v789
  %v809 = vadd.f32 %v699, %v794
  %v810 = vadd.f32 %v700, %v799
  %v811 = vadd.f32 %v701, %v804
  %v812 = vtanh.pop %v807
  %v813 = vtanh.pop %v808
  %v814 = vtanh.pop %v809
  %v815 = vtanh.pop %v810
  %v816 = vtanh.pop %v811
  %v817 = vxor.u32 %v807, 2147483648
  %v818 = vxor.u32 %v808, 2147483648
  %v819 = vxor.u32 %v809, 2147483648
  %v820 = vxor.u32 %v810, 2147483648
  %v821 = vxor.u32 %v811, 2147483648
  %v822 = vmul.f32 %v817, 1.442695
  %v823 = vpow.pop %v822
  %v824 = vmul.f32 %v818, 1.442695
  %v825 = vpow.pop %v824
  %v826 = vmul.f32 %v819, 1.442695
  %v827 = vpow.pop %v826
  %v828 = vmul.f32 %v820, 1.442695
  %v829 = vpow.pop %v828
  %v830 = vmul.f32 %v821, 1.442695
  %v831 = vpow.pop %v830
  %v832 = vadd.f32 %v823, 1.0
  %v833 = vadd.f32 %v825, 1.0
  %v834 = vadd.f32 %v827, 1.0
  %v835 = vadd.f32 %v829, 1.0
  %v836 = vadd.f32 %v831, 1.0
  %v837 = vrcp.pop %v832
  %v838 = vmul.f32 1.0, %v837
  %v839 = vrcp.pop %v833
  %v840 = vmul.f32 1.0, %v839
  %v841 = vrcp.pop %v834
  %v842 = vmul.f32 1.0, %v841
  %v843 = vrcp.pop %v835
  %v844 = vmul.f32 1.0, %v843
  %v845 = vrcp.pop %v836
  %v846 = vmul.f32 1.0, %v845
  %v847 = vsel %vm370, %v812, %v838
  %v848 = vsel %vm370, %v813, %v840
  %v849 = vsel %vm370, %v814, %v842
  %v850 = vsel %vm370, %v815, %v844
  %v851 = vsel %vm370, %v816, %v846
  %857 = vrot.lane.b32.xlu0 %v667, 32
  %v858 = vpop.permute.xlu0 %857
  %859 = vrot.lane.b32.xlu0 %v668, 32
  %v860 = vpop.permute.xlu0 %859
  %861 = vrot.lane.b32.xlu0 %v669, 32
  %v862 = vpop.permute.xlu0 %861
  %863 = vrot.lane.b32.xlu0 %v670, 32
  %v864 = vpop.permute.xlu0 %863
  %865 = vrot.lane.b32.xlu0 %v671, 32
  %v866 = vpop.permute.xlu0 %865
  %v872 = vmul.f32 %v847, %v858
  %v873 = vmul.f32 %v848, %v860
  %v874 = vmul.f32 %v849, %v862
  %v875 = vmul.f32 %v850, %v864
  %v876 = vmul.f32 %v851, %v866
  %882 = vrot.lane.b32.xlu0 %v847, 64
  %v883 = vpop.permute.xlu0 %882
  %884 = vrot.lane.b32.xlu0 %v848, 64
  %v885 = vpop.permute.xlu0 %884
  %886 = vrot.lane.b32.xlu0 %v849, 64
  %v887 = vpop.permute.xlu0 %886
  %888 = vrot.lane.b32.xlu0 %v850, 64
  %v889 = vpop.permute.xlu0 %888
  %890 = vrot.lane.b32.xlu0 %v851, 64
  %v891 = vpop.permute.xlu0 %890
  %v897 = vmul.f32 %v847, %v883
  %v898 = vmul.f32 %v848, %v885
  %v899 = vmul.f32 %v849, %v887
  %v900 = vmul.f32 %v850, %v889
  %v901 = vmul.f32 %v851, %v891
  %907 = vrot.lane.b32.xlu0 %v897, 32
  %v908 = vpop.permute.xlu0 %907
  %909 = vrot.lane.b32.xlu0 %v898, 32
  %v910 = vpop.permute.xlu0 %909
  %911 = vrot.lane.b32.xlu0 %v899, 32
  %v912 = vpop.permute.xlu0 %911
  %913 = vrot.lane.b32.xlu0 %v900, 32
  %v914 = vpop.permute.xlu0 %913
  %915 = vrot.lane.b32.xlu0 %v901, 32
  %v916 = vpop.permute.xlu0 %915
  %v922 = vadd.f32 %v872, %v908
  %v923 = vadd.f32 %v873, %v910
  %v924 = vadd.f32 %v874, %v912
  %v925 = vadd.f32 %v875, %v914
  %v926 = vadd.f32 %v876, %v916
  %v927 = vtanh.pop %v922
  %v928 = vtanh.pop %v923
  %v929 = vtanh.pop %v924
  %v930 = vtanh.pop %v925
  %v931 = vtanh.pop %v926
  %937 = vrot.lane.b32.xlu0 %v927, 64
  %v938 = vpop.permute.xlu0 %937
  %939 = vrot.lane.b32.xlu0 %v928, 64
  %v940 = vpop.permute.xlu0 %939
  %941 = vrot.lane.b32.xlu0 %v929, 64
  %v942 = vpop.permute.xlu0 %941
  %943 = vrot.lane.b32.xlu0 %v930, 64
  %v944 = vpop.permute.xlu0 %943
  %945 = vrot.lane.b32.xlu0 %v931, 64
  %v946 = vpop.permute.xlu0 %945
  %v952 = vmul.f32 %v847, %v938
  %v953 = vmul.f32 %v848, %v940
  %v954 = vmul.f32 %v849, %v942
  %v955 = vmul.f32 %v850, %v944
  %v956 = vmul.f32 %v851, %v946
  %v957 = vld [vmem:[#allocation2 + $0x50] sm:$0xff]
  %v958 = vld [vmem:[#allocation2 + $0x58] sm:$0xff]
  %v959 = vld [vmem:[#allocation2 + $0x60] sm:$0xff]
  %v960 = vld [vmem:[#allocation2 + $0x68] sm:$0xff]
  %v961 = vld [vmem:[#allocation2 + $0x70] sm:$0xff]
  %967 = vrot.lane.b32.xlu0 %v952, 32
  %v968 = vpop.permute.xlu0 %967
  %969 = vrot.lane.b32.xlu0 %v953, 32
  %v970 = vpop.permute.xlu0 %969
  %971 = vrot.lane.b32.xlu0 %v954, 32
  %v972 = vpop.permute.xlu0 %971
  %973 = vrot.lane.b32.xlu0 %v955, 32
  %v974 = vpop.permute.xlu0 %973
  %975 = vrot.lane.b32.xlu0 %v956, 32
  %v976 = vpop.permute.xlu0 %975
  %v977 = vsel %vm391, %v968, 0
  %v979 = vsel %vm391, %v970, 0
  %v981 = vsel %vm391, %v972, 0
  %v983 = vsel %vm391, %v974, 0
  %v985 = vsel %vm391, %v976, 0
  %987 = vmatprep.subr.mxu0 0.0
  %988 = vmatpush1.msra.mxu0 %v372
  %989 = vmatprep.subr.mxu0 0.0
  %990 = vmatpush1.msra.mxu0 %v373
  %991 = vmatprep.subr.mxu0 0.0
  %992 = vmatpush1.msra.mxu0 %v374
  %993 = vmatprep.subr.mxu0 0.0
  %994 = vmatpush1.msra.mxu0 %v375
  %995 = vmatprep.subr.mxu0 0.0
  %996 = vmatpush1.msra.mxu0 0.0
  %997 = vmatprep.subr.mxu0 0.0
  %998 = vmatpush1.msra.mxu0 0.0
  %999 = vmatprep.subr.mxu0 0.0
  %1000 = vmatpush1.msra.mxu0 0.0
  %1001 = vmatprep.subr.mxu0 0.0
  %1002 = vmatpush1.msra.mxu0 0.0
  %1003 = vmatprep.subr.mxu0 0.0
  %1004 = vmatpush1.msra.mxu0 0.0
  %1005 = vmatprep.subr.mxu0 0.0
  %1006 = vmatpush1.msra.mxu0 0.0
  %1007 = vmatprep.subr.mxu0 0.0
  %1008 = vmatpush1.msra.mxu0 0.0
  %1009 = vmatprep.subr.mxu0 0.0
  %1010 = vmatpush1.msra.mxu0 0.0
  %1011 = vmatprep.subr.mxu0 0.0
  %1012 = vmatpush1.msra.mxu0 0.0
  %1013 = vmatprep.subr.mxu0 0.0
  %1014 = vmatpush1.msra.mxu0 0.0
  %1015 = vmatprep.subr.mxu0 0.0
  %1016 = vmatpush1.msra.mxu0 0.0
  %1017 = vmatprep.subr.mxu0 0.0
  %1018 = vmatpush1.msra.mxu0 0.0
  %1019 = vmatprep.subr.mxu0 0.0
  %1020 = vmatpush1.msra.mxu0 0.0
  %1021 = vmatprep.subr.mxu0 0.0
  %1022 = vmatpush1.msra.mxu0 0.0
  %1023 = vmatprep.subr.mxu0 0.0
  %1024 = vmatpush1.msra.mxu0 0.0
  %1025 = vmatprep.subr.mxu0 0.0
  %1026 = vmatpush1.msra.mxu0 0.0
  %1027 = vmatprep.subr.mxu0 0.0
  %1028 = vmatpush1.msra.mxu0 0.0
  %1029 = vmatprep.subr.mxu0 0.0
  %1030 = vmatpush1.msra.mxu0 0.0
  %1031 = vmatprep.subr.mxu0 0.0
  %1032 = vmatpush1.msra.mxu0 0.0
  %1033 = vmatprep.subr.mxu0 0.0
  %1034 = vmatpush1.msra.mxu0 0.0
  %1035 = vmatprep.subr.mxu0 0.0
  %1036 = vmatpush1.msra.mxu0 0.0
  %1037 = vmatprep.subr.mxu0 0.0
  %1038 = vmatpush1.msra.mxu0 0.0
  %1039 = vmatprep.subr.mxu0 0.0
  %1040 = vmatpush1.msra.mxu0 0.0
  %1041 = vmatprep.subr.mxu0 0.0
  %1042 = vmatpush1.msra.mxu0 0.0
  %1043 = vmatprep.subr.mxu0 0.0
  %1044 = vmatpush1.msra.mxu0 0.0
  %1045 = vmatprep.subr.mxu0 0.0
  %1046 = vmatpush1.msra.mxu0 0.0
  %1047 = vmatprep.subr.mxu0 0.0
  %1048 = vmatpush1.msra.mxu0 0.0
  %1049 = vmatprep.subr.mxu0 0.0
  %1050 = vmatpush1.msra.mxu0 0.0
  %1051 = vmatprep.mubr.f32.mxu0 0.0
  %1052 = vmatmul.mubr.f32.gmra.mrb[0].mxu0 %v977
  %v1053 = vpop.f32.mrb[0].mxu0
  %v1054 = vadd.f32 0.0, %v1053
  %v1055 = vpop.f32.mrb[0].mxu0
  %1056 = vmatprep.mubr.f32.mxu0 0.0
  %1057 = vmatmul.mubr.f32.gmra.mrb[0].mxu0 %v979
  %v1058 = vpop.f32.mrb[0].mxu0
  %v1059 = vadd.f32 0.0, %v1058
  %v1060 = vpop.f32.mrb[0].mxu0
  %1061 = vmatprep.mubr.f32.mxu0 0.0
  %1062 = vmatmul.mubr.f32.gmra.mrb[0].mxu0 %v981
  %v1063 = vpop.f32.mrb[0].mxu0
  %v1064 = vadd.f32 0.0, %v1063
  %v1065 = vpop.f32.mrb[0].mxu0
  %1066 = vmatprep.mubr.f32.mxu0 0.0
  %1067 = vmatmul.mubr.f32.gmra.mrb[0].mxu0 %v983
  %v1068 = vpop.f32.mrb[0].mxu0
  %v1069 = vadd.f32 0.0, %v1068
  %v1070 = vpop.f32.mrb[0].mxu0
  %1071 = vmatprep.mubr.f32.mxu0 0.0
  %1072 = vmatmul.mubr.f32.gmra.mrb[0].mxu0 %v985
  %v1073 = vpop.f32.mrb[0].mxu0
  %v1074 = vadd.f32 0.0, %v1073
  %v1075 = vpop.f32.mrb[0].mxu0
  %1076 = vdwg.mxu0
  %v1077 = vadd.f32 %v957, %v1054
  %v1078 = vadd.f32 %v958, %v1059
  %v1079 = vadd.f32 %v959, %v1064
  %v1080 = vadd.f32 %v960, %v1069
  %v1081 = vadd.f32 %v961, %v1074
  %v1082 = vtanh.pop %v1077
  %v1083 = vtanh.pop %v1078
  %v1084 = vtanh.pop %v1079
  %v1085 = vtanh.pop %v1080
  %v1086 = vtanh.pop %v1081
  %v1087 = vxor.u32 %v1077, 2147483648
  %v1088 = vxor.u32 %v1078, 2147483648
  %v1089 = vxor.u32 %v1079, 2147483648
  %v1090 = vxor.u32 %v1080, 2147483648
  %v1091 = vxor.u32 %v1081, 2147483648
  %v1092 = vmul.f32 %v1087, 1.442695
  %v1093 = vpow.pop %v1092
  %v1094 = vmul.f32 %v1088, 1.442695
  %v1095 = vpow.pop %v1094
  %v1096 = vmul.f32 %v1089, 1.442695
  %v1097 = vpow.pop %v1096
  %v1098 = vmul.f32 %v1090, 1.442695
  %v1099 = vpow.pop %v1098
  %v1100 = vmul.f32 %v1091, 1.442695
  %v1101 = vpow.pop %v1100
  %v1102 = vadd.f32 %v1093, 1.0
  %v1103 = vadd.f32 %v1095, 1.0
  %v1104 = vadd.f32 %v1097, 1.0
  %v1105 = vadd.f32 %v1099, 1.0
  %v1106 = vadd.f32 %v1101, 1.0
  %v1107 = vrcp.pop %v1102
  %v1108 = vmul.f32 1.0, %v1107
  %v1109 = vrcp.pop %v1103
  %v1110 = vmul.f32 1.0, %v1109
  %v1111 = vrcp.pop %v1104
  %v1112 = vmul.f32 1.0, %v1111
  %v1113 = vrcp.pop %v1105
  %v1114 = vmul.f32 1.0, %v1113
  %v1115 = vrcp.pop %v1106
  %v1116 = vmul.f32 1.0, %v1115
  %v1117 = vsel %vm370, %v1082, %v1108
  %v1118 = vsel %vm370, %v1083, %v1110
  %v1119 = vsel %vm370, %v1084, %v1112
  %v1120 = vsel %vm370, %v1085, %v1114
  %v1121 = vsel %vm370, %v1086, %v1116
  %v1122 = vmul.f32 %v1117, %v922
  %v1123 = vmul.f32 %v1118, %v923
  %v1124 = vmul.f32 %v1119, %v924
  %v1125 = vmul.f32 %v1120, %v925
  %v1126 = vmul.f32 %v1121, %v926
  %1132 = vrot.lane.b32.xlu0 %v1117, 64
  %v1133 = vpop.permute.xlu0 %1132
  %1134 = vrot.lane.b32.xlu0 %v1118, 64
  %v1135 = vpop.permute.xlu0 %1134
  %1136 = vrot.lane.b32.xlu0 %v1119, 64
  %v1137 = vpop.permute.xlu0 %1136
  %1138 = vrot.lane.b32.xlu0 %v1120, 64
  %v1139 = vpop.permute.xlu0 %1138
  %1140 = vrot.lane.b32.xlu0 %v1121, 64
  %v1141 = vpop.permute.xlu0 %1140
  %v1147 = vmul.f32 %v1117, %v1133
  %v1148 = vmul.f32 %v1118, %v1135
  %v1149 = vmul.f32 %v1119, %v1137
  %v1150 = vmul.f32 %v1120, %v1139
  %v1151 = vmul.f32 %v1121, %v1141
  %1157 = vrot.lane.b32.xlu0 %v1147, 32
  %v1158 = vpop.permute.xlu0 %1157
  %1159 = vrot.lane.b32.xlu0 %v1148, 32
  %v1160 = vpop.permute.xlu0 %1159
  %1161 = vrot.lane.b32.xlu0 %v1149, 32
  %v1162 = vpop.permute.xlu0 %1161
  %1163 = vrot.lane.b32.xlu0 %v1150, 32
  %v1164 = vpop.permute.xlu0 %1163
  %1165 = vrot.lane.b32.xlu0 %v1151, 32
  %v1166 = vpop.permute.xlu0 %1165
  %v1172 = vadd.f32 %v1122, %v1158
  %v1173 = vadd.f32 %v1123, %v1160
  %v1174 = vadd.f32 %v1124, %v1162
  %v1175 = vadd.f32 %v1125, %v1164
  %v1176 = vadd.f32 %v1126, %v1166
  %v1177 = vtanh.pop %v1172
  %v1178 = vtanh.pop %v1173
  %v1179 = vtanh.pop %v1174
  %v1180 = vtanh.pop %v1175
  %v1181 = vtanh.pop %v1176
  %1187 = vrot.lane.b32.xlu0 %v1177, 64
  %v1188 = vpop.permute.xlu0 %1187
  %1189 = vrot.lane.b32.xlu0 %v1178, 64
  %v1190 = vpop.permute.xlu0 %1189
  %1191 = vrot.lane.b32.xlu0 %v1179, 64
  %v1192 = vpop.permute.xlu0 %1191
  %1193 = vrot.lane.b32.xlu0 %v1180, 64
  %v1194 = vpop.permute.xlu0 %1193
  %1195 = vrot.lane.b32.xlu0 %v1181, 64
  %v1196 = vpop.permute.xlu0 %1195
  %v1202 = vmul.f32 %v1117, %v1188
  %v1203 = vmul.f32 %v1118, %v1190
  %v1204 = vmul.f32 %v1119, %v1192
  %v1205 = vmul.f32 %v1120, %v1194
  %v1206 = vmul.f32 %v1121, %v1196
  %v1207 = vld [vmem:[#allocation2 + $0x78] sm:$0xff]
  %v1208 = vld [vmem:[#allocation2 + $0x80] sm:$0xff]
  %v1209 = vld [vmem:[#allocation2 + $0x88] sm:$0xff]
  %v1210 = vld [vmem:[#allocation2 + $0x90] sm:$0xff]
  %v1211 = vld [vmem:[#allocation2 + $0x98] sm:$0xff]
  %1217 = vrot.lane.b32.xlu0 %v1202, 32
  %v1218 = vpop.permute.xlu0 %1217
  %1219 = vrot.lane.b32.xlu0 %v1203, 32
  %v1220 = vpop.permute.xlu0 %1219
  %1221 = vrot.lane.b32.xlu0 %v1204, 32
  %v1222 = vpop.permute.xlu0 %1221
  %1223 = vrot.lane.b32.xlu0 %v1205, 32
  %v1224 = vpop.permute.xlu0 %1223
  %1225 = vrot.lane.b32.xlu0 %v1206, 32
  %v1226 = vpop.permute.xlu0 %1225
  %v1227 = vsel %vm391, %v1218, 0
  %v1229 = vsel %vm391, %v1220, 0
  %v1231 = vsel %vm391, %v1222, 0
  %v1233 = vsel %vm391, %v1224, 0
  %v1235 = vsel %vm391, %v1226, 0
  %1237 = vmatprep.subr.mxu0 0.0
  %1238 = vmatpush1.msra.mxu0 %v372
  %1239 = vmatprep.subr.mxu0 0.0
  %1240 = vmatpush1.msra.mxu0 %v373
  %1241 = vmatprep.subr.mxu0 0.0
  %1242 = vmatpush1.msra.mxu0 %v374
  %1243 = vmatprep.subr.mxu0 0.0
  %1244 = vmatpush1.msra.mxu0 %v375
  %1245 = vmatprep.subr.mxu0 0.0
  %1246 = vmatpush1.msra.mxu0 0.0
  %1247 = vmatprep.subr.mxu0 0.0
  %1248 = vmatpush1.msra.mxu0 0.0
  %1249 = vmatprep.subr.mxu0 0.0
  %1250 = vmatpush1.msra.mxu0 0.0
  %1251 = vmatprep.subr.mxu0 0.0
  %1252 = vmatpush1.msra.mxu0 0.0
  %1253 = vmatprep.subr.mxu0 0.0
  %1254 = vmatpush1.msra.mxu0 0.0
  %1255 = vmatprep.subr.mxu0 0.0
  %1256 = vmatpush1.msra.mxu0 0.0
  %1257 = vmatprep.subr.mxu0 0.0
  %1258 = vmatpush1.msra.mxu0 0.0
  %1259 = vmatprep.subr.mxu0 0.0
  %1260 = vmatpush1.msra.mxu0 0.0
  %1261 = vmatprep.subr.mxu0 0.0
  %1262 = vmatpush1.msra.mxu0 0.0
  %1263 = vmatprep.subr.mxu0 0.0
  %1264 = vmatpush1.msra.mxu0 0.0
  %1265 = vmatprep.subr.mxu0 0.0
  %1266 = vmatpush1.msra.mxu0 0.0
  %1267 = vmatprep.subr.mxu0 0.0
  %1268 = vmatpush1.msra.mxu0 0.0
  %1269 = vmatprep.subr.mxu0 0.0
  %1270 = vmatpush1.msra.mxu0 0.0
  %1271 = vmatprep.subr.mxu0 0.0
  %1272 = vmatpush1.msra.mxu0 0.0
  %1273 = vmatprep.subr.mxu0 0.0
  %1274 = vmatpush1.msra.mxu0 0.0
  %1275 = vmatprep.subr.mxu0 0.0
  %1276 = vmatpush1.msra.mxu0 0.0
  %1277 = vmatprep.subr.mxu0 0.0
  %1278 = vmatpush1.msra.mxu0 0.0
  %1279 = vmatprep.subr.mxu0 0.0
  %1280 = vmatpush1.msra.mxu0 0.0
  %1281 = vmatprep.subr.mxu0 0.0
  %1282 = vmatpush1.msra.mxu0 0.0
  %1283 = vmatprep.subr.mxu0 0.0
  %1284 = vmatpush1.msra.mxu0 0.0
  %1285 = vmatprep.subr.mxu0 0.0
  %1286 = vmatpush1.msra.mxu0 0.0
  %1287 = vmatprep.subr.mxu0 0.0
  %1288 = vmatpush1.msra.mxu0 0.0
  %1289 = vmatprep.subr.mxu0 0.0
  %1290 = vmatpush1.msra.mxu0 0.0
  %1291 = vmatprep.subr.mxu0 0.0
  %1292 = vmatpush1.msra.mxu0 0.0
  %1293 = vmatprep.subr.mxu0 0.0
  %1294 = vmatpush1.msra.mxu0 0.0
  %1295 = vmatprep.subr.mxu0 0.0
  %1296 = vmatpush1.msra.mxu0 0.0
  %1297 = vmatprep.subr.mxu0 0.0
  %1298 = vmatpush1.msra.mxu0 0.0
  %1299 = vmatprep.subr.mxu0 0.0
  %1300 = vmatpush1.msra.mxu0 0.0
  %1301 = vmatprep.mubr.f32.mxu0 0.0
  %1302 = vmatmul.mubr.f32.gmra.mrb[0].mxu0 %v1227
  %v1303 = vpop.f32.mrb[0].mxu0
  %v1304 = vadd.f32 0.0, %v1303
  %v1305 = vpop.f32.mrb[0].mxu0
  %1306 = vmatprep.mubr.f32.mxu0 0.0
  %1307 = vmatmul.mubr.f32.gmra.mrb[0].mxu0 %v1229
  %v1308 = vpop.f32.mrb[0].mxu0
  %v1309 = vadd.f32 0.0, %v1308
  %v1310 = vpop.f32.mrb[0].mxu0
  %1311 = vmatprep.mubr.f32.mxu0 0.0
  %1312 = vmatmul.mubr.f32.gmra.mrb[0].mxu0 %v1231
  %v1313 = vpop.f32.mrb[0].mxu0
  %v1314 = vadd.f32 0.0, %v1313
  %v1315 = vpop.f32.mrb[0].mxu0
  %1316 = vmatprep.mubr.f32.mxu0 0.0
  %1317 = vmatmul.mubr.f32.gmra.mrb[0].mxu0 %v1233
  %v1318 = vpop.f32.mrb[0].mxu0
  %v1319 = vadd.f32 0.0, %v1318
  %v1320 = vpop.f32.mrb[0].mxu0
  %1321 = vmatprep.mubr.f32.mxu0 0.0
  %1322 = vmatmul.mubr.f32.gmra.mrb[0].mxu0 %v1235
  %v1323 = vpop.f32.mrb[0].mxu0
  %v1324 = vadd.f32 0.0, %v1323
  %v1325 = vpop.f32.mrb[0].mxu0
  %1326 = vdwg.mxu0
  %v1327 = vadd.f32 %v1207, %v1304
  %v1328 = vadd.f32 %v1208, %v1309
  %v1329 = vadd.f32 %v1209, %v1314
  %v1330 = vadd.f32 %v1210, %v1319
  %v1331 = vadd.f32 %v1211, %v1324
  %v1332 = vtanh.pop %v1327
  %v1333 = vtanh.pop %v1328
  %v1334 = vtanh.pop %v1329
  %v1335 = vtanh.pop %v1330
  %v1336 = vtanh.pop %v1331
  %v1337 = vxor.u32 %v1327, 2147483648
  %v1338 = vxor.u32 %v1328, 2147483648
  %v1339 = vxor.u32 %v1329, 2147483648
  %v1340 = vxor.u32 %v1330, 2147483648
  %v1341 = vxor.u32 %v1331, 2147483648
  %v1342 = vmul.f32 %v1337, 1.442695
  %v1343 = vpow.pop %v1342
  %v1344 = vmul.f32 %v1338, 1.442695
  %v1345 = vpow.pop %v1344
  %v1346 = vmul.f32 %v1339, 1.442695
  %v1347 = vpow.pop %v1346
  %v1348 = vmul.f32 %v1340, 1.442695
  %v1349 = vpow.pop %v1348
  %v1350 = vmul.f32 %v1341, 1.442695
  %v1351 = vpow.pop %v1350
  %v1352 = vadd.f32 %v1343, 1.0
  %v1353 = vadd.f32 %v1345, 1.0
  %v1354 = vadd.f32 %v1347, 1.0
  %v1355 = vadd.f32 %v1349, 1.0
  %v1356 = vadd.f32 %v1351, 1.0
  %v1357 = vrcp.pop %v1352
  %v1358 = vmul.f32 1.0, %v1357
  %v1359 = vrcp.pop %v1353
  %v1360 = vmul.f32 1.0, %v1359
  %v1361 = vrcp.pop %v1354
  %v1362 = vmul.f32 1.0, %v1361
  %v1363 = vrcp.pop %v1355
  %v1364 = vmul.f32 1.0, %v1363
  %v1365 = vrcp.pop %v1356
  %v1366 = vmul.f32 1.0, %v1365
  %v1367 = vsel %vm370, %v1332, %v1358
  %v1368 = vsel %vm370, %v1333, %v1360
  %v1369 = vsel %vm370, %v1334, %v1362
  %v1370 = vsel %vm370, %v1335, %v1364
  %v1371 = vsel %vm370, %v1336, %v1366
  %v1372 = vmul.f32 %v1367, %v1172
  %v1373 = vmul.f32 %v1368, %v1173
  %v1374 = vmul.f32 %v1369, %v1174
  %v1375 = vmul.f32 %v1370, %v1175
  %v1376 = vmul.f32 %v1371, %v1176
  %1382 = vrot.lane.b32.xlu0 %v1367, 64
  %v1383 = vpop.permute.xlu0 %1382
  %1384 = vrot.lane.b32.xlu0 %v1368, 64
  %v1385 = vpop.permute.xlu0 %1384
  %1386 = vrot.lane.b32.xlu0 %v1369, 64
  %v1387 = vpop.permute.xlu0 %1386
  %1388 = vrot.lane.b32.xlu0 %v1370, 64
  %v1389 = vpop.permute.xlu0 %1388
  %1390 = vrot.lane.b32.xlu0 %v1371, 64
  %v1391 = vpop.permute.xlu0 %1390
  %v1397 = vmul.f32 %v1367, %v1383
  %v1398 = vmul.f32 %v1368, %v1385
  %v1399 = vmul.f32 %v1369, %v1387
  %v1400 = vmul.f32 %v1370, %v1389
  %v1401 = vmul.f32 %v1371, %v1391
  %1407 = vrot.lane.b32.xlu0 %v1397, 32
  %v1408 = vpop.permute.xlu0 %1407
  %1409 = vrot.lane.b32.xlu0 %v1398, 32
  %v1410 = vpop.permute.xlu0 %1409
  %1411 = vrot.lane.b32.xlu0 %v1399, 32
  %v1412 = vpop.permute.xlu0 %1411
  %1413 = vrot.lane.b32.xlu0 %v1400, 32
  %v1414 = vpop.permute.xlu0 %1413
  %1415 = vrot.lane.b32.xlu0 %v1401, 32
  %v1416 = vpop.permute.xlu0 %1415
  %v1422 = vadd.f32 %v1372, %v1408
  %v1423 = vadd.f32 %v1373, %v1410
  %v1424 = vadd.f32 %v1374, %v1412
  %v1425 = vadd.f32 %v1375, %v1414
  %v1426 = vadd.f32 %v1376, %v1416
  %v1427 = vtanh.pop %v1422
  %v1428 = vtanh.pop %v1423
  %v1429 = vtanh.pop %v1424
  %v1430 = vtanh.pop %v1425
  %v1431 = vtanh.pop %v1426
  %1437 = vrot.lane.b32.xlu0 %v1427, 64
  %v1438 = vpop.permute.xlu0 %1437
  %1439 = vrot.lane.b32.xlu0 %v1428, 64
  %v1440 = vpop.permute.xlu0 %1439
  %1441 = vrot.lane.b32.xlu0 %v1429, 64
  %v1442 = vpop.permute.xlu0 %1441
  %1443 = vrot.lane.b32.xlu0 %v1430, 64
  %v1444 = vpop.permute.xlu0 %1443
  %1445 = vrot.lane.b32.xlu0 %v1431, 64
  %v1446 = vpop.permute.xlu0 %1445
  %v1452 = vmul.f32 %v1367, %v1438
  %v1453 = vmul.f32 %v1368, %v1440
  %v1454 = vmul.f32 %v1369, %v1442
  %v1455 = vmul.f32 %v1370, %v1444
  %v1456 = vmul.f32 %v1371, %v1446
  %v1457 = vld [vmem:[#allocation2 + $0xa0] sm:$0xff]
  %v1458 = vld [vmem:[#allocation2 + $0xa8] sm:$0xff]
  %v1459 = vld [vmem:[#allocation2 + $0xb0] sm:$0xff]
  %v1460 = vld [vmem:[#allocation2 + $0xb8] sm:$0xff]
  %v1461 = vld [vmem:[#allocation2 + $0xc0] sm:$0xff]
  %1467 = vrot.lane.b32.xlu0 %v1452, 32
  %v1468 = vpop.permute.xlu0 %1467
  %1469 = vrot.lane.b32.xlu0 %v1453, 32
  %v1470 = vpop.permute.xlu0 %1469
  %1471 = vrot.lane.b32.xlu0 %v1454, 32
  %v1472 = vpop.permute.xlu0 %1471
  %1473 = vrot.lane.b32.xlu0 %v1455, 32
  %v1474 = vpop.permute.xlu0 %1473
  %1475 = vrot.lane.b32.xlu0 %v1456, 32
  %v1476 = vpop.permute.xlu0 %1475
  %v1477 = vsel %vm391, %v1468, 0
  %v1479 = vsel %vm391, %v1470, 0
  %v1481 = vsel %vm391, %v1472, 0
  %v1483 = vsel %vm391, %v1474, 0
  %v1485 = vsel %vm391, %v1476, 0
  %1487 = vmatprep.subr.mxu0 0.0
  %1488 = vmatpush1.msra.mxu0 %v372
  %1489 = vmatprep.subr.mxu0 0.0
  %1490 = vmatpush1.msra.mxu0 %v373
  %1491 = vmatprep.subr.mxu0 0.0
  %1492 = vmatpush1.msra.mxu0 %v374
  %1493 = vmatprep.subr.mxu0 0.0
  %1494 = vmatpush1.msra.mxu0 %v375
  %1495 = vmatprep.subr.mxu0 0.0
  %1496 = vmatpush1.msra.mxu0 0.0
  %1497 = vmatprep.subr.mxu0 0.0
  %1498 = vmatpush1.msra.mxu0 0.0
  %1499 = vmatprep.subr.mxu0 0.0
  %1500 = vmatpush1.msra.mxu0 0.0
  %1501 = vmatprep.subr.mxu0 0.0
  %1502 = vmatpush1.msra.mxu0 0.0
  %1503 = vmatprep.subr.mxu0 0.0
  %1504 = vmatpush1.msra.mxu0 0.0
  %1505 = vmatprep.subr.mxu0 0.0
  %1506 = vmatpush1.msra.mxu0 0.0
  %1507 = vmatprep.subr.mxu0 0.0
  %1508 = vmatpush1.msra.mxu0 0.0
  %1509 = vmatprep.subr.mxu0 0.0
  %1510 = vmatpush1.msra.mxu0 0.0
  %1511 = vmatprep.subr.mxu0 0.0
  %1512 = vmatpush1.msra.mxu0 0.0
  %1513 = vmatprep.subr.mxu0 0.0
  %1514 = vmatpush1.msra.mxu0 0.0
  %1515 = vmatprep.subr.mxu0 0.0
  %1516 = vmatpush1.msra.mxu0 0.0
  %1517 = vmatprep.subr.mxu0 0.0
  %1518 = vmatpush1.msra.mxu0 0.0
  %1519 = vmatprep.subr.mxu0 0.0
  %1520 = vmatpush1.msra.mxu0 0.0
  %1521 = vmatprep.subr.mxu0 0.0
  %1522 = vmatpush1.msra.mxu0 0.0
  %1523 = vmatprep.subr.mxu0 0.0
  %1524 = vmatpush1.msra.mxu0 0.0
  %1525 = vmatprep.subr.mxu0 0.0
  %1526 = vmatpush1.msra.mxu0 0.0
  %1527 = vmatprep.subr.mxu0 0.0
  %1528 = vmatpush1.msra.mxu0 0.0
  %1529 = vmatprep.subr.mxu0 0.0
  %1530 = vmatpush1.msra.mxu0 0.0
  %1531 = vmatprep.subr.mxu0 0.0
  %1532 = vmatpush1.msra.mxu0 0.0
  %1533 = vmatprep.subr.mxu0 0.0
  %1534 = vmatpush1.msra.mxu0 0.0
  %1535 = vmatprep.subr.mxu0 0.0
  %1536 = vmatpush1.msra.mxu0 0.0
  %1537 = vmatprep.subr.mxu0 0.0
  %1538 = vmatpush1.msra.mxu0 0.0
  %1539 = vmatprep.subr.mxu0 0.0
  %1540 = vmatpush1.msra.mxu0 0.0
  %1541 = vmatprep.subr.mxu0 0.0
  %1542 = vmatpush1.msra.mxu0 0.0
  %1543 = vmatprep.subr.mxu0 0.0
  %1544 = vmatpush1.msra.mxu0 0.0
  %1545 = vmatprep.subr.mxu0 0.0
  %1546 = vmatpush1.msra.mxu0 0.0
  %1547 = vmatprep.subr.mxu0 0.0
  %1548 = vmatpush1.msra.mxu0 0.0
  %1549 = vmatprep.subr.mxu0 0.0
  %1550 = vmatpush1.msra.mxu0 0.0
  %1551 = vmatprep.mubr.f32.mxu0 0.0
  %1552 = vmatmul.mubr.f32.gmra.mrb[0].mxu0 %v1477
  %v1553 = vpop.f32.mrb[0].mxu0
  %v1554 = vadd.f32 0.0, %v1553
  %v1555 = vpop.f32.mrb[0].mxu0
  %1556 = vmatprep.mubr.f32.mxu0 0.0
  %1557 = vmatmul.mubr.f32.gmra.mrb[0].mxu0 %v1479
  %v1558 = vpop.f32.mrb[0].mxu0
  %v1559 = vadd.f32 0.0, %v1558
  %v1560 = vpop.f32.mrb[0].mxu0
  %1561 = vmatprep.mubr.f32.mxu0 0.0
  %1562 = vmatmul.mubr.f32.gmra.mrb[0].mxu0 %v1481
  %v1563 = vpop.f32.mrb[0].mxu0
  %v1564 = vadd.f32 0.0, %v1563
  %v1565 = vpop.f32.mrb[0].mxu0
  %1566 = vmatprep.mubr.f32.mxu0 0.0
  %1567 = vmatmul.mubr.f32.gmra.mrb[0].mxu0 %v1483
  %v1568 = vpop.f32.mrb[0].mxu0
  %v1569 = vadd.f32 0.0, %v1568
  %v1570 = vpop.f32.mrb[0].mxu0
  %1571 = vmatprep.mubr.f32.mxu0 0.0
  %1572 = vmatmul.mubr.f32.gmra.mrb[0].mxu0 %v1485
  %v1573 = vpop.f32.mrb[0].mxu0
  %v1574 = vadd.f32 0.0, %v1573
  %v1575 = vpop.f32.mrb[0].mxu0
  %1576 = vdwg.mxu0
  %v1577 = vadd.f32 %v1457, %v1554
  %v1578 = vadd.f32 %v1458, %v1559
  %v1579 = vadd.f32 %v1459, %v1564
  %v1580 = vadd.f32 %v1460, %v1569
  %v1581 = vadd.f32 %v1461, %v1574
  %v1582 = vtanh.pop %v1577
  %v1583 = vtanh.pop %v1578
  %v1584 = vtanh.pop %v1579
  %v1585 = vtanh.pop %v1580
  %v1586 = vtanh.pop %v1581
  %v1587 = vxor.u32 %v1577, 2147483648
  %v1588 = vxor.u32 %v1578, 2147483648
  %v1589 = vxor.u32 %v1579, 2147483648
  %v1590 = vxor.u32 %v1580, 2147483648
  %v1591 = vxor.u32 %v1581, 2147483648
  %v1592 = vmul.f32 %v1587, 1.442695
  %v1593 = vpow.pop %v1592
  %v1594 = vmul.f32 %v1588, 1.442695
  %v1595 = vpow.pop %v1594
  %v1596 = vmul.f32 %v1589, 1.442695
  %v1597 = vpow.pop %v1596
  %v1598 = vmul.f32 %v1590, 1.442695
  %v1599 = vpow.pop %v1598
  %v1600 = vmul.f32 %v1591, 1.442695
  %v1601 = vpow.pop %v1600
  %v1602 = vadd.f32 %v1593, 1.0
  %v1603 = vadd.f32 %v1595, 1.0
  %v1604 = vadd.f32 %v1597, 1.0
  %v1605 = vadd.f32 %v1599, 1.0
  %v1606 = vadd.f32 %v1601, 1.0
  %v1607 = vrcp.pop %v1602
  %v1608 = vmul.f32 1.0, %v1607
  %v1609 = vrcp.pop %v1603
  %v1610 = vmul.f32 1.0, %v1609
  %v1611 = vrcp.pop %v1604
  %v1612 = vmul.f32 1.0, %v1611
  %v1613 = vrcp.pop %v1605
  %v1614 = vmul.f32 1.0, %v1613
  %v1615 = vrcp.pop %v1606
  %v1616 = vmul.f32 1.0, %v1615
  %v1617 = vsel %vm370, %v1582, %v1608
  %v1618 = vsel %vm370, %v1583, %v1610
  %v1619 = vsel %vm370, %v1584, %v1612
  %v1620 = vsel %vm370, %v1585, %v1614
  %v1621 = vsel %vm370, %v1586, %v1616
  %v1622 = vmul.f32 %v1617, %v1422
  %v1623 = vmul.f32 %v1618, %v1423
  %v1624 = vmul.f32 %v1619, %v1424
  %v1625 = vmul.f32 %v1620, %v1425
  %v1626 = vmul.f32 %v1621, %v1426
  %1632 = vrot.lane.b32.xlu0 %v1617, 64
  %v1633 = vpop.permute.xlu0 %1632
  %1634 = vrot.lane.b32.xlu0 %v1618, 64
  %v1635 = vpop.permute.xlu0 %1634
  %1636 = vrot.lane.b32.xlu0 %v1619, 64
  %v1637 = vpop.permute.xlu0 %1636
  %1638 = vrot.lane.b32.xlu0 %v1620, 64
  %v1639 = vpop.permute.xlu0 %1638
  %1640 = vrot.lane.b32.xlu0 %v1621, 64
  %v1641 = vpop.permute.xlu0 %1640
  %v1647 = vmul.f32 %v1617, %v1633
  %v1648 = vmul.f32 %v1618, %v1635
  %v1649 = vmul.f32 %v1619, %v1637
  %v1650 = vmul.f32 %v1620, %v1639
  %v1651 = vmul.f32 %v1621, %v1641
  %1657 = vrot.lane.b32.xlu0 %v1647, 32
  %v1658 = vpop.permute.xlu0 %1657
  %1659 = vrot.lane.b32.xlu0 %v1648, 32
  %v1660 = vpop.permute.xlu0 %1659
  %1661 = vrot.lane.b32.xlu0 %v1649, 32
  %v1662 = vpop.permute.xlu0 %1661
  %1663 = vrot.lane.b32.xlu0 %v1650, 32
  %v1664 = vpop.permute.xlu0 %1663
  %1665 = vrot.lane.b32.xlu0 %v1651, 32
  %v1666 = vpop.permute.xlu0 %1665
  %v1672 = vadd.f32 %v1622, %v1658
  %v1673 = vadd.f32 %v1623, %v1660
  %v1674 = vadd.f32 %v1624, %v1662
  %v1675 = vadd.f32 %v1625, %v1664
  %v1676 = vadd.f32 %v1626, %v1666
  %v1677 = vtanh.pop %v1672
  %v1678 = vtanh.pop %v1673
  %v1679 = vtanh.pop %v1674
  %v1680 = vtanh.pop %v1675
  %v1681 = vtanh.pop %v1676
  %1687 = vrot.lane.b32.xlu0 %v1677, 64
  %v1688 = vpop.permute.xlu0 %1687
  %1689 = vrot.lane.b32.xlu0 %v1678, 64
  %v1690 = vpop.permute.xlu0 %1689
  %1691 = vrot.lane.b32.xlu0 %v1679, 64
  %v1692 = vpop.permute.xlu0 %1691
  %1693 = vrot.lane.b32.xlu0 %v1680, 64
  %v1694 = vpop.permute.xlu0 %1693
  %1695 = vrot.lane.b32.xlu0 %v1681, 64
  %v1696 = vpop.permute.xlu0 %1695
  %v1702 = vmul.f32 %v1617, %v1688
  %v1703 = vmul.f32 %v1618, %v1690
  %v1704 = vmul.f32 %v1619, %v1692
  %v1705 = vmul.f32 %v1620, %v1694
  %v1706 = vmul.f32 %v1621, %v1696
  %1712 = vrot.lane.b32.xlu0 %v1422, 96
  %v1713 = vpop.permute.xlu0 %1712
  %1714 = vrot.lane.b32.xlu0 %v1423, 96
  %v1715 = vpop.permute.xlu0 %1714
  %1716 = vrot.lane.b32.xlu0 %v1424, 96
  %v1717 = vpop.permute.xlu0 %1716
  %1718 = vrot.lane.b32.xlu0 %v1425, 96
  %v1719 = vpop.permute.xlu0 %1718
  %1720 = vrot.lane.b32.xlu0 %v1426, 96
  %v1721 = vpop.permute.xlu0 %1720
  %1732 = vrot.lane.b32.xlu0 %v1672, 96
  %v1733 = vpop.permute.xlu0 %1732
  %1734 = vrot.lane.b32.xlu0 %v1673, 96
  %v1735 = vpop.permute.xlu0 %1734
  %1736 = vrot.lane.b32.xlu0 %v1674, 96
  %v1737 = vpop.permute.xlu0 %1736
  %1738 = vrot.lane.b32.xlu0 %v1675, 96
  %v1739 = vpop.permute.xlu0 %1738
  %1740 = vrot.lane.b32.xlu0 %v1676, 96
  %v1741 = vpop.permute.xlu0 %1740
  %v1747 = vsel %vm371, %v1713, %v1733
  %v1748 = vsel %vm371, %v1715, %v1735
  %v1749 = vsel %vm371, %v1717, %v1737
  %v1750 = vsel %vm371, %v1719, %v1739
  %v1751 = vsel %vm371, %v1721, %v1741
  %1762 = vrot.lane.b32.xlu0 %v1702, 32
  %v1763 = vpop.permute.xlu0 %1762
  %1764 = vrot.lane.b32.xlu0 %v1703, 32
  %v1765 = vpop.permute.xlu0 %1764
  %1766 = vrot.lane.b32.xlu0 %v1704, 32
  %v1767 = vpop.permute.xlu0 %1766
  %1768 = vrot.lane.b32.xlu0 %v1705, 32
  %v1769 = vpop.permute.xlu0 %1768
  %1770 = vrot.lane.b32.xlu0 %v1706, 32
  %v1771 = vpop.permute.xlu0 %1770
  %v1777 = vsel %vm371, %v1468, %v1763
  %v1778 = vsel %vm371, %v1470, %v1765
  %v1779 = vsel %vm371, %v1472, %v1767
  %v1780 = vsel %vm371, %v1474, %v1769
  %v1781 = vsel %vm371, %v1476, %v1771
  %1782 = vst.msk [vmem:[%s12] sm:$0xff] %vm75, %v1777
  %1783 = vst.msk [vmem:[%s12 + $0x8] sm:$0xff] %vm75, %v1778
  %1784 = vst.msk [vmem:[%s12 + $0x10] sm:$0xff] %vm75, %v1779
  %1785 = vst.msk [vmem:[%s12 + $0x18] sm:$0xff] %vm75, %v1780
  %1786 = vst.msk [vmem:[%s12 + $0x20] sm:$0xff] %vm75, %v1781
  %1792 = vrot.lane.b32.xlu0 %v1777, 112
  %v1793 = vpop.permute.xlu0 %1792
  %1794 = vrot.lane.b32.xlu0 %v1778, 112
  %v1795 = vpop.permute.xlu0 %1794
  %1796 = vrot.lane.b32.xlu0 %v1779, 112
  %v1797 = vpop.permute.xlu0 %1796
  %1798 = vrot.lane.b32.xlu0 %v1780, 112
  %v1799 = vpop.permute.xlu0 %1798
  %1800 = vrot.lane.b32.xlu0 %v1781, 112
  %v1801 = vpop.permute.xlu0 %1800
  %s1807 = scalar_lea.vmem %s12, 40
  %1808 = vst.msk [vmem:[%s1807] sm:$0xff] %vm75, %v1793
  %1809 = vst.msk [vmem:[%s1807 + $0x8] sm:$0xff] %vm75, %v1795
  %1810 = vst.msk [vmem:[%s1807 + $0x10] sm:$0xff] %vm75, %v1797
  %1811 = vst.msk [vmem:[%s1807 + $0x18] sm:$0xff] %vm75, %v1799
  %1812 = vst.msk [vmem:[%s1807 + $0x20] sm:$0xff] %vm75, %v1801
  %1813 = vst.msk [vmem:[%s13] sm:$0xff] %vm75, %v1747
  %1814 = vst.msk [vmem:[%s13 + $0x8] sm:$0xff] %vm75, %v1748
  %1815 = vst.msk [vmem:[%s13 + $0x10] sm:$0xff] %vm75, %v1749
  %1816 = vst.msk [vmem:[%s13 + $0x18] sm:$0xff] %vm75, %v1750
  %1817 = vst.msk [vmem:[%s13 + $0x20] sm:$0xff] %vm75, %v1751
  %1823 = vrot.lane.b32.xlu0 %v1747, 112
  %v1824 = vpop.permute.xlu0 %1823
  %1825 = vrot.lane.b32.xlu0 %v1748, 112
  %v1826 = vpop.permute.xlu0 %1825
  %1827 = vrot.lane.b32.xlu0 %v1749, 112
  %v1828 = vpop.permute.xlu0 %1827
  %1829 = vrot.lane.b32.xlu0 %v1750, 112
  %v1830 = vpop.permute.xlu0 %1829
  %1831 = vrot.lane.b32.xlu0 %v1751, 112
  %v1832 = vpop.permute.xlu0 %1831
  %s1838 = scalar_lea.vmem %s13, 40
  %1839 = vst.msk [vmem:[%s1838] sm:$0xff] %vm75, %v1824
  %1840 = vst.msk [vmem:[%s1838 + $0x8] sm:$0xff] %vm75, %v1826
  %1841 = vst.msk [vmem:[%s1838 + $0x10] sm:$0xff] %vm75, %v1828
  %1842 = vst.msk [vmem:[%s1838 + $0x18] sm:$0xff] %vm75, %v1830
  %1843 = vst.msk [vmem:[%s1838 + $0x20] sm:$0xff] %vm75, %v1832
  %v1844 = vld [vmem:[%s6] sm:$0xff]
  %v1845 = vld [vmem:[%s6 + $0x8] sm:$0xff]
  %v1846 = vld [vmem:[%s7] sm:$0xff]
  %v1847 = vld [vmem:[%s7 + $0x8] sm:$0xff]
  %vm1848 = vcmask 1043456
  %v1849 = vrot.slane %v1779, 4
  %v1850 = vrot.slane %v1780, 4
  %v1851 = vsel %vm1848, %v1849, %v1850
  %v1852 = vrot.slane %v1781, 4
  %v1853 = vsel %vm1848, %v1850, %v1852
  %1854 = vrot.lane.b32.xlu0 %v1851, 112
  %v1855 = vpop.permute.xlu0 %1854
  %1856 = vrot.lane.b32.xlu0 %v1853, 112
  %v1857 = vpop.permute.xlu0 %1856
  %1858 = vrot.lane.b32.xlu0 %v1852, 112
  %v1859 = vpop.permute.xlu0 %1858
  %v1860 = vsel %vm75, %v1855, 0
  %v1862 = vsel %vm75, %v1857, 0
  %v1864 = vsel %vm75, %v1859, 0
  %1866 = vmatprep.subr.mxu0 0.0
  %1867 = vmatpush1.msra.mxu0 %v1846
  %1868 = vmatprep.subr.mxu0 0.0
  %1869 = vmatpush1.msra.mxu0 %v1847
  %1870 = vmatprep.subr.mxu0 0.0
  %1871 = vmatpush1.msra.mxu0 0.0
  %1872 = vmatprep.subr.mxu0 0.0
  %1873 = vmatpush1.msra.mxu0 0.0
  %1874 = vmatprep.subr.mxu0 0.0
  %1875 = vmatpush1.msra.mxu0 0.0
  %1876 = vmatprep.subr.mxu0 0.0
  %1877 = vmatpush1.msra.mxu0 0.0
  %1878 = vmatprep.subr.mxu0 0.0
  %1879 = vmatpush1.msra.mxu0 0.0
  %1880 = vmatprep.subr.mxu0 0.0
  %1881 = vmatpush1.msra.mxu0 0.0
  %1882 = vmatprep.subr.mxu0 0.0
  %1883 = vmatpush1.msra.mxu0 0.0
  %1884 = vmatprep.subr.mxu0 0.0
  %1885 = vmatpush1.msra.mxu0 0.0
  %1886 = vmatprep.subr.mxu0 0.0
  %1887 = vmatpush1.msra.mxu0 0.0
  %1888 = vmatprep.subr.mxu0 0.0
  %1889 = vmatpush1.msra.mxu0 0.0
  %1890 = vmatprep.subr.mxu0 0.0
  %1891 = vmatpush1.msra.mxu0 0.0
  %1892 = vmatprep.subr.mxu0 0.0
  %1893 = vmatpush1.msra.mxu0 0.0
  %1894 = vmatprep.subr.mxu0 0.0
  %1895 = vmatpush1.msra.mxu0 0.0
  %1896 = vmatprep.subr.mxu0 0.0
  %1897 = vmatpush1.msra.mxu0 0.0
  %1898 = vmatprep.subr.mxu0 0.0
  %1899 = vmatpush1.msra.mxu0 0.0
  %1900 = vmatprep.subr.mxu0 0.0
  %1901 = vmatpush1.msra.mxu0 0.0
  %1902 = vmatprep.subr.mxu0 0.0
  %1903 = vmatpush1.msra.mxu0 0.0
  %1904 = vmatprep.subr.mxu0 0.0
  %1905 = vmatpush1.msra.mxu0 0.0
  %1906 = vmatprep.subr.mxu0 0.0
  %1907 = vmatpush1.msra.mxu0 0.0
  %1908 = vmatprep.subr.mxu0 0.0
  %1909 = vmatpush1.msra.mxu0 0.0
  %1910 = vmatprep.subr.mxu0 0.0
  %1911 = vmatpush1.msra.mxu0 0.0
  %1912 = vmatprep.subr.mxu0 0.0
  %1913 = vmatpush1.msra.mxu0 0.0
  %1914 = vmatprep.subr.mxu0 0.0
  %1915 = vmatpush1.msra.mxu0 0.0
  %1916 = vmatprep.subr.mxu0 0.0
  %1917 = vmatpush1.msra.mxu0 0.0
  %1918 = vmatprep.subr.mxu0 0.0
  %1919 = vmatpush1.msra.mxu0 0.0
  %1920 = vmatprep.subr.mxu0 0.0
  %1921 = vmatpush1.msra.mxu0 0.0
  %1922 = vmatprep.subr.mxu0 0.0
  %1923 = vmatpush1.msra.mxu0 0.0
  %1924 = vmatprep.subr.mxu0 0.0
  %1925 = vmatpush1.msra.mxu0 0.0
  %1926 = vmatprep.subr.mxu0 0.0
  %1927 = vmatpush1.msra.mxu0 0.0
  %1928 = vmatprep.subr.mxu0 0.0
  %1929 = vmatpush1.msra.mxu0 0.0
  %1930 = vmatprep.mubr.f32.mxu0 0.0
  %1931 = vmatmul.mubr.f32.gmra.mrb[0].mxu0 %v1860
  %v1932 = vpop.f32.mrb[0].mxu0
  %v1933 = vadd.f32 0.0, %v1932
  %v1934 = vpop.f32.mrb[0].mxu0
  %1935 = vmatprep.mubr.f32.mxu0 0.0
  %1936 = vmatmul.mubr.f32.gmra.mrb[0].mxu0 %v1862
  %v1937 = vpop.f32.mrb[0].mxu0
  %v1938 = vadd.f32 0.0, %v1937
  %v1939 = vpop.f32.mrb[0].mxu0
  %1940 = vmatprep.mubr.f32.mxu0 0.0
  %1941 = vmatmul.mubr.f32.gmra.mrb[0].mxu0 %v1864
  %v1942 = vpop.f32.mrb[0].mxu0
  %v1943 = vadd.f32 0.0, %v1942
  %v1944 = vpop.f32.mrb[0].mxu0
  %1945 = vdwg.mxu0
  %v1946 = vsel %vm75, %v1793, 0
  %v1948 = vsel %vm75, %v1795, 0
  %v1950 = vsel %vm75, %v1797, 0
  %1952 = vmatprep.subr.mxu0 0.0
  %1953 = vmatpush1.msra.mxu0 %v1844
  %1954 = vmatprep.subr.mxu0 0.0
  %1955 = vmatpush1.msra.mxu0 %v1845
  %1956 = vmatprep.subr.mxu0 0.0
  %1957 = vmatpush1.msra.mxu0 0.0
  %1958 = vmatprep.subr.mxu0 0.0
  %1959 = vmatpush1.msra.mxu0 0.0
  %1960 = vmatprep.subr.mxu0 0.0
  %1961 = vmatpush1.msra.mxu0 0.0
  %1962 = vmatprep.subr.mxu0 0.0
  %1963 = vmatpush1.msra.mxu0 0.0
  %1964 = vmatprep.subr.mxu0 0.0
  %1965 = vmatpush1.msra.mxu0 0.0
  %1966 = vmatprep.subr.mxu0 0.0
  %1967 = vmatpush1.msra.mxu0 0.0
  %1968 = vmatprep.subr.mxu0 0.0
  %1969 = vmatpush1.msra.mxu0 0.0
  %1970 = vmatprep.subr.mxu0 0.0
  %1971 = vmatpush1.msra.mxu0 0.0
  %1972 = vmatprep.subr.mxu0 0.0
  %1973 = vmatpush1.msra.mxu0 0.0
  %1974 = vmatprep.subr.mxu0 0.0
  %1975 = vmatpush1.msra.mxu0 0.0
  %1976 = vmatprep.subr.mxu0 0.0
  %1977 = vmatpush1.msra.mxu0 0.0
  %1978 = vmatprep.subr.mxu0 0.0
  %1979 = vmatpush1.msra.mxu0 0.0
  %1980 = vmatprep.subr.mxu0 0.0
  %1981 = vmatpush1.msra.mxu0 0.0
  %1982 = vmatprep.subr.mxu0 0.0
  %1983 = vmatpush1.msra.mxu0 0.0
  %1984 = vmatprep.subr.mxu0 0.0
  %1985 = vmatpush1.msra.mxu0 0.0
  %1986 = vmatprep.subr.mxu0 0.0
  %1987 = vmatpush1.msra.mxu0 0.0
  %1988 = vmatprep.subr.mxu0 0.0
  %1989 = vmatpush1.msra.mxu0 0.0
  %1990 = vmatprep.subr.mxu0 0.0
  %1991 = vmatpush1.msra.mxu0 0.0
  %1992 = vmatprep.subr.mxu0 0.0
  %1993 = vmatpush1.msra.mxu0 0.0
  %1994 = vmatprep.subr.mxu0 0.0
  %1995 = vmatpush1.msra.mxu0 0.0
  %1996 = vmatprep.subr.mxu0 0.0
  %1997 = vmatpush1.msra.mxu0 0.0
  %1998 = vmatprep.subr.mxu0 0.0
  %1999 = vmatpush1.msra.mxu0 0.0
  %2000 = vmatprep.subr.mxu0 0.0
  %2001 = vmatpush1.msra.mxu0 0.0
  %2002 = vmatprep.subr.mxu0 0.0
  %2003 = vmatpush1.msra.mxu0 0.0
  %2004 = vmatprep.subr.mxu0 0.0
  %2005 = vmatpush1.msra.mxu0 0.0
  %2006 = vmatprep.subr.mxu0 0.0
  %2007 = vmatpush1.msra.mxu0 0.0
  %2008 = vmatprep.subr.mxu0 0.0
  %2009 = vmatpush1.msra.mxu0 0.0
  %2010 = vmatprep.subr.mxu0 0.0
  %2011 = vmatpush1.msra.mxu0 0.0
  %2012 = vmatprep.subr.mxu0 0.0
  %2013 = vmatpush1.msra.mxu0 0.0
  %2014 = vmatprep.subr.mxu0 0.0
  %2015 = vmatpush1.msra.mxu0 0.0
  %2016 = vmatprep.mubr.f32.mxu0 0.0
  %2017 = vmatmul.mubr.f32.gmra.mrb[0].mxu0 %v1946
  %v2018 = vpop.f32.mrb[0].mxu0
  %v2019 = vadd.f32 %v1933, %v2018
  %v2020 = vpop.f32.mrb[0].mxu0
  %2021 = vmatprep.mubr.f32.mxu0 0.0
  %2022 = vmatmul.mubr.f32.gmra.mrb[0].mxu0 %v1948
  %v2023 = vpop.f32.mrb[0].mxu0
  %v2024 = vadd.f32 %v1938, %v2023
  %v2025 = vpop.f32.mrb[0].mxu0
  %2026 = vmatprep.mubr.f32.mxu0 0.0
  %2027 = vmatmul.mubr.f32.gmra.mrb[0].mxu0 %v1950
  %v2028 = vpop.f32.mrb[0].mxu0
  %v2029 = vadd.f32 %v1943, %v2028
  %v2030 = vpop.f32.mrb[0].mxu0
  %2031 = vdwg.mxu0
  %v2032 = vld [vmem:[%s8] sm:$0x1]
  %v2034 = vlaneseq
  %v2035 = vshrl.u32 %v2034, 7
  %v2036 = vsub.s32 0, %v2035
  %v2037 = vrot.slane %v2032, %v2036
  %v2039 = vadd.f32 %v2019, %v2037
  %v2040 = vadd.f32 %v2024, %v2037
  %v2041 = vadd.f32 %v2029, %v2037
  %v2042 = vmax.f32 %v2039, 0.0
  %v2043 = vmax.f32 %v2040, 0.0
  %v2044 = vmax.f32 %v2041, 0.0
  %v2045 = vld [vmem:[%s9] sm:$0xff]
  %v2046 = vld [vmem:[%s9 + $0x8] sm:$0xff]
  %v2047 = vld [vmem:[%s9 + $0x10] sm:$0xff]
  %v2048 = vld [vmem:[%s9 + $0x18] sm:$0xff]
  %v2049 = vld [vmem:[%s9 + $0x20] sm:$0xff]
  %v2050 = vld [vmem:[%s9 + $0x28] sm:$0xff]
  %v2051 = vld [vmem:[%s9 + $0x30] sm:$0xff]
  %v2052 = vld [vmem:[%s9 + $0x38] sm:$0xff]
  %v2053 = vld [vmem:[%s9 + $0x40] sm:$0xff]
  %v2054 = vld [vmem:[%s9 + $0x48] sm:$0xff]
  %v2055 = vld [vmem:[%s9 + $0x50] sm:$0xff]
  %v2056 = vld [vmem:[%s9 + $0x58] sm:$0xff]
  %v2057 = vld [vmem:[%s9 + $0x60] sm:$0xff]
  %v2058 = vld [vmem:[%s9 + $0x68] sm:$0xff]
  %v2059 = vld [vmem:[%s9 + $0x70] sm:$0xff]
  %v2060 = vld [vmem:[%s9 + $0x78] sm:$0xff]
  %v2061 = vld [vmem:[%s10] sm:$0x1]
  %v2063 = vlaneseq
  %v2064 = vshrl.u32 %v2063, 7
  %v2065 = vsub.s32 0, %v2064
  %v2066 = vrot.slane %v2061, %v2065
  %2068 = vmatprep.subr.mxu0 0.0
  %2069 = vmatpush1.msra.mxu0 %v2045
  %2070 = vmatprep.subr.mxu0 0.0
  %2071 = vmatpush1.msra.mxu0 %v2046
  %2072 = vmatprep.subr.mxu0 0.0
  %2073 = vmatpush1.msra.mxu0 %v2047
  %2074 = vmatprep.subr.mxu0 0.0
  %2075 = vmatpush1.msra.mxu0 %v2048
  %2076 = vmatprep.subr.mxu0 0.0
  %2077 = vmatpush1.msra.mxu0 %v2049
  %2078 = vmatprep.subr.mxu0 0.0
  %2079 = vmatpush1.msra.mxu0 %v2050
  %2080 = vmatprep.subr.mxu0 0.0
  %2081 = vmatpush1.msra.mxu0 %v2051
  %2082 = vmatprep.subr.mxu0 0.0
  %2083 = vmatpush1.msra.mxu0 %v2052
  %2084 = vmatprep.subr.mxu0 0.0
  %2085 = vmatpush1.msra.mxu0 %v2053
  %2086 = vmatprep.subr.mxu0 0.0
  %2087 = vmatpush1.msra.mxu0 %v2054
  %2088 = vmatprep.subr.mxu0 0.0
  %2089 = vmatpush1.msra.mxu0 %v2055
  %2090 = vmatprep.subr.mxu0 0.0
  %2091 = vmatpush1.msra.mxu0 %v2056
  %2092 = vmatprep.subr.mxu0 0.0
  %2093 = vmatpush1.msra.mxu0 %v2057
  %2094 = vmatprep.subr.mxu0 0.0
  %2095 = vmatpush1.msra.mxu0 %v2058
  %2096 = vmatprep.subr.mxu0 0.0
  %2097 = vmatpush1.msra.mxu0 %v2059
  %2098 = vmatprep.subr.mxu0 0.0
  %2099 = vmatpush1.msra.mxu0 %v2060
  %2100 = vmatprep.subr.mxu0 0.0
  %2101 = vmatpush1.msra.mxu0 0.0
  %2102 = vmatprep.subr.mxu0 0.0
  %2103 = vmatpush1.msra.mxu0 0.0
  %2104 = vmatprep.subr.mxu0 0.0
  %2105 = vmatpush1.msra.mxu0 0.0
  %2106 = vmatprep.subr.mxu0 0.0
  %2107 = vmatpush1.msra.mxu0 0.0
  %2108 = vmatprep.subr.mxu0 0.0
  %2109 = vmatpush1.msra.mxu0 0.0
  %2110 = vmatprep.subr.mxu0 0.0
  %2111 = vmatpush1.msra.mxu0 0.0
  %2112 = vmatprep.subr.mxu0 0.0
  %2113 = vmatpush1.msra.mxu0 0.0
  %2114 = vmatprep.subr.mxu0 0.0
  %2115 = vmatpush1.msra.mxu0 0.0
  %2116 = vmatprep.subr.mxu0 0.0
  %2117 = vmatpush1.msra.mxu0 0.0
  %2118 = vmatprep.subr.mxu0 0.0
  %2119 = vmatpush1.msra.mxu0 0.0
  %2120 = vmatprep.subr.mxu0 0.0
  %2121 = vmatpush1.msra.mxu0 0.0
  %2122 = vmatprep.subr.mxu0 0.0
  %2123 = vmatpush1.msra.mxu0 0.0
  %2124 = vmatprep.subr.mxu0 0.0
  %2125 = vmatpush1.msra.mxu0 0.0
  %2126 = vmatprep.subr.mxu0 0.0
  %2127 = vmatpush1.msra.mxu0 0.0
  %2128 = vmatprep.subr.mxu0 0.0
  %2129 = vmatpush1.msra.mxu0 0.0
  %2130 = vmatprep.subr.mxu0 0.0
  %2131 = vmatpush1.msra.mxu0 0.0
  %2132 = vmatprep.mubr.f32.mxu0 0.0
  %2133 = vmatmul.mubr.f32.gmra.mrb[0].mxu0 %v2042
  %v2134 = vpop.f32.mrb[0].mxu0
  %v2135 = vadd.f32 %v2066, %v2134
  %v2136 = vpop.f32.mrb[0].mxu0
  %2137 = vmatprep.mubr.f32.mxu0 0.0
  %2138 = vmatmul.mubr.f32.gmra.mrb[0].mxu0 %v2043
  %v2139 = vpop.f32.mrb[0].mxu0
  %v2140 = vadd.f32 %v2066, %v2139
  %v2141 = vpop.f32.mrb[0].mxu0
  %2142 = vmatprep.mubr.f32.mxu0 0.0
  %2143 = vmatmul.mubr.f32.gmra.mrb[0].mxu0 %v2044
  %v2144 = vpop.f32.mrb[0].mxu0
  %v2145 = vadd.f32 %v2066, %v2144
  %v2146 = vpop.f32.mrb[0].mxu0
  %2147 = vdwg.mxu0
  %vm2148 = vcmask 15360
  %2149 = vst.msk [vmem:[%s11] sm:$0xff] %vm2148, %v2135
  %2150 = vst.msk [vmem:[%s11 + $0x8] sm:$0xff] %vm2148, %v2140
  %vm2151 = vcmask 11264
  %2152 = vst.msk [vmem:[%s11 + $0x10] sm:$0xf] %vm2151, %v2145
  // Predicated region
  $region46: #{tpu_custom_call.1} parent=0 // pred_check
    _
  $region47: #{tpu_custom_call.1} parent=0 // pred_check_branch
    %2154 = sbr.rel (0) target = $region49
  $region48: #{tpu_custom_call.1} parent=0 // pred_region
    _
  $region49: #{tpu_custom_call.1} parent=0 // pred_fallthru
    _
  // Predicated region
  $region50: #{tpu_custom_call.1} parent=0 // pred_check
    _
  $region51: #{tpu_custom_call.1} parent=0 // pred_check_branch
    %2156 = sbr.rel (0) target = $region53
  $region52: #{tpu_custom_call.1} parent=0 // pred_region
    _
  $region53: #{tpu_custom_call.1} parent=0 // pred_fallthru
    _
  // Predicated region
  $region54: #{tpu_custom_call.1} parent=0 // pred_check
    _
  $region55: #{tpu_custom_call.1} parent=0 // pred_check_branch
    %2158 = sbr.rel (0) target = $region57
  $region56: #{tpu_custom_call.1} parent=0 // pred_region
    _
  $region57: #{tpu_custom_call.1} parent=0 // pred_fallthru
    _
  // Predicated region
  $region58: #{tpu_custom_call.1} parent=0 // pred_check
    _
  $region59: #{tpu_custom_call.1} parent=0 // pred_check_branch
    %2160 = sbr.rel (0) target = $region61
  $region60: #{tpu_custom_call.1} parent=0 // pred_region
    _
  $region61: #{tpu_custom_call.1} parent=0 // pred_fallthru
    _
  // Predicated region
  $region62: #{tpu_custom_call.1} parent=0 // pred_check
    _
  $region63: #{tpu_custom_call.1} parent=0 // pred_check_branch
    %2162 = sbr.rel (0) target = $region65
  $region64: #{tpu_custom_call.1} parent=0 // pred_region
    _
  $region65: #{tpu_custom_call.1} parent=0 // pred_fallthru
    _
  // Predicated region
  $region66: #{tpu_custom_call.1} parent=0 // pred_check
    _
  $region67: #{tpu_custom_call.1} parent=0 // pred_check_branch
    %2164 = sbr.rel (0) target = $region69
  $region68: #{tpu_custom_call.1} parent=0 // pred_region
    _
  $region69: #{tpu_custom_call.1} parent=0 // pred_fallthru
    _

</llo_original>
